<compile_context>
chip_gen: v6e
topology: v6e:2x2x1
jax: 0.10.0
libtpu: 0.0.40
codegen_flags: <defaults>
</compile_context>

<pallas_src>
import functools
import math

import jax
import jax.numpy as jnp
from jax.experimental import pallas as pl
from jax.experimental.pallas import tpu as pltpu


def _round_up(x, m):
    return ((x + m - 1) // m) * m


def _device_budgets():
    """(streamed enc-block VMEM budget, vmem_limit_bytes) per TPU generation."""
    kind = ""
    try:
        kind = jax.devices()[0].device_kind.lower()
    except Exception:
        pass
    if ("v5" in kind) or ("v6" in kind):
        # 128 MiB physical VMEM: large streamed blocks to approach the HBM roofline.
        return 8 << 20, 96 << 20
    # v7x (64 MiB physical VMEM) and unknown chips: conservative so 2x enc buffers
    # + f32 proj/energy temps + resident weights + score scratch always fit.
    return 4 << 20, 48 << 20


def _padded_slab_bytes(Bb, H, itemsize):
    """True VMEM bytes of one (Bb, H) slab after (sublane, 128-lane) tile padding."""
    sub = max(1, 32 // itemsize)              # sublanes per 4 KiB tile for this dtype
    return (_round_up(Bb, sub) // sub) * (_round_up(H, 128) // 128) * 4096


def _pick_tiles(B, T, H, itemsize, enc_budget):
    """Pick (Bb, Tt).

    Bb: large (bigger contiguous DMA segments from the (T,B,H) stream, fewer grid
        steps) but leaving grid_b >= 2 when B allows so both v7x TensorCores get
        batch work.  Must be a multiple of 8 or equal B (partial blocks are fine).
    Tt: always a multiple of 128 (lane-dense score rows), sized from the streamed
        block's PADDED VMEM footprint so double-buffering + f32 temps fit.
    """
    if B % 8 == 0 and B >= 16:
        Bb = max(8, (min(B // 2, 64) // 8) * 8)   # multiple of 8, grid_b >= 2
    elif B > 40:
        Bb = 32                                   # partial last batch block: writes masked
    else:
        Bb = B                                    # small batch: single batch block
    T128 = _round_up(T, 128)
    rows = max(1, enc_budget // _padded_slab_bytes(Bb, H, itemsize))
    Tt = max(128, (rows // 128) * 128)
    Tt = min(Tt, T128)
    return Bb, Tt


def _attn_fused_kernel(hid_ref, enc_ref, w1_ref, w2_ref, bias_ref, v_ref,
                       out_ref, hidproj_sc, score_sc, *, valid_len, t_tile):
    """Fused score + masked softmax for one (batch block, T block) grid cell.

    hid_ref    : (Bb, H)        streamed dtype
    enc_ref    : (Tt, Bb, H)    streamed dtype, straight from the (T, B, H) layout
    w1_ref     : (H, H)         resident
    w2_ref     : (H, H)         resident
    bias_ref   : (1, H)  f32    resident
    v_ref      : (1, H)  f32    resident
    out_ref    : (Bb, T_tot) f32  output block (resident across the T axis)
    hidproj_sc : (Bb, H)  f32   scratch: hidden @ W1 + bias (hoisted per batch block)
    score_sc   : (T_tot, Bb) f32 scratch: accumulated scores for the whole T row
    """
    ti = pl.program_id(1)

    # Hoist the hidden projection (and bias broadcast) out of the T loop: computed
    # once per batch block (the T grid axis is "arbitrary", so ti == 0 runs first).
    @pl.when(ti == 0)
    def _():
        hidproj_sc[...] = (
            jnp.dot(hid_ref[...], w1_ref[...], preferred_element_type=jnp.float32)
            + bias_ref[...])

    tt, bb, h = enc_ref.shape

    # One clean 2-D (Tt*Bb, H) x (H, H) MXU matmul over the streamed block, f32 acc.
    # TODO(synk): when Bb % 8 != 0 or H % 128 != 0 this leading-dim collapse may
    # insert a VMEM re-pack copy; check the bundle dump if that regime matters.
    enc2 = enc_ref[...].reshape(tt * bb, h)
    proj = jnp.dot(enc2, w2_ref[...], preferred_element_type=jnp.float32)
    proj = proj.reshape(tt, bb, h)

    # f32 epilogue (v5e has no bf16 VPU/EUP): EUP tanh, VPU mul, XLU lane-reduce.
    energy = jnp.tanh(proj + hidproj_sc[...][None, :, :])             # (Tt, Bb, H)
    score_tb = jnp.sum(energy * v_ref[...][None, :, :], axis=-1)      # (Tt, Bb)

    # Accumulate this T block into the resident score row (aligned sublane store;
    # the transpose is deferred to the epilogue -> once per row, not per block).
    start = pl.multiple_of(ti * t_tile, 128)
    score_sc[pl.ds(start, t_tile), :] = score_tb

    # Fused epilogue at the last T block: single transpose, tail mask, stable
    # softmax, and the only write of the output block (no scores HBM round trip).
    @pl.when(ti == pl.num_programs(1) - 1)
    def _():
        s = score_sc[...].T                                           # (Bb, T_tot)
        col = jax.lax.broadcasted_iota(jnp.int32, s.shape, 1)
        s = jnp.where(col < valid_len, s, -jnp.inf)                   # mask padded tail
        m = jnp.max(s, axis=-1, keepdims=True)
        e = jnp.exp(s - m)
        out_ref[...] = e / jnp.sum(e, axis=-1, keepdims=True)


def attn_forward(hidden, encoder_outputs, W, b, v, *, t_tile=None):
    """JAX wrapper reproducing Attn.forward.

    hidden          : (B, H)
    encoder_outputs : (T, B, H)  -- streamed in its native dtype and layout
                      (pass bf16 inputs for the halved-bandwidth path on v6e/v7x;
                       casting an f32 HBM array here would add an extra HBM pass).
    W               : (H, 2H)    nn.Linear weight
    b               : (H,)       nn.Linear bias
    v               : (H,)       attention vector
    t_tile          : optional T tile override (rounded up to a multiple of 128)
    returns         : (B, 1, T) float32
    """
    T, B, H = encoder_outputs.shape
    assert hidden.shape == (B, H) and W.shape == (H, 2 * H)

    cdt = encoder_outputs.dtype
    # Linear(cat([hidden, enc], -1)) == hidden @ W1 + enc @ W2 + bias
    w1 = W[:, :H].T.astype(cdt)                     # (H, H) applied to `hidden`
    w2 = W[:, H:].T.astype(cdt)                     # (H, H) applied to encoder outputs
    hid = hidden.astype(cdt)
    bias2 = b.reshape(1, H).astype(jnp.float32)     # f32 epilogue constants
    v2 = v.reshape(1, H).astype(jnp.float32)

    enc_budget, vmem_limit = _device_budgets()
    Bb, Tt = _pick_tiles(B, T, H, jnp.dtype(cdt).itemsize, enc_budget)
    if t_tile is not None:
        Tt = min(_round_up(int(t_tile), 128), _round_up(T, 128))
    grid_b = pl.cdiv(B, Bb)
    grid_t = pl.cdiv(T, Tt)
    T_tot = grid_t * Tt                             # lane-dense padded score width

    probs = pl.pallas_call(
        functools.partial(_attn_fused_kernel, valid_len=T, t_tile=Tt),
        out_shape=jax.ShapeDtypeStruct((B, T), jnp.float32),
        grid=(grid_b, grid_t),
        in_specs=[
            pl.BlockSpec((Bb, H), lambda bi, ti: (bi, 0)),          # hidden
            pl.BlockSpec((Tt, Bb, H), lambda bi, ti: (ti, bi, 0)),  # enc, (T,B,H) layout
            pl.BlockSpec((H, H), lambda bi, ti: (0, 0)),            # W1 (resident)
            pl.BlockSpec((H, H), lambda bi, ti: (0, 0)),            # W2 (resident)
            pl.BlockSpec((1, H), lambda bi, ti: (0, 0)),            # bias (resident)
            pl.BlockSpec((1, H), lambda bi, ti: (0, 0)),            # v (resident)
        ],
        # Output block is resident across the T axis and written once at the last
        # T block; OOB tail columns / batch rows are masked on the HBM writeback.
        out_specs=pl.BlockSpec((Bb, T_tot), lambda bi, ti: (bi, 0)),
        scratch_shapes=[pltpu.VMEM((Bb, H), jnp.float32),           # hoisted hid proj
                        pltpu.VMEM((T_tot, Bb), jnp.float32)],      # score row accum
        compiler_params=pltpu.CompilerParams(
            dimension_semantics=("parallel", "arbitrary"),
            vmem_limit_bytes=vmem_limit),
    )(hid, encoder_outputs, w1, w2, bias2, v2)

    return probs[:, None, :]                        # metadata-only reshape to (B, 1, T)


def attn_reference(hidden, encoder_outputs, W, b, v):
    """Pure-JAX reference mirroring the PyTorch forward exactly."""
    T, B, H = encoder_outputs.shape
    Hrep = jnp.transpose(jnp.broadcast_to(hidden[None], (T, B, H)), (1, 0, 2))  # (B,T,H)
    enc = jnp.transpose(encoder_outputs, (1, 0, 2))                              # (B,T,H)
    cat = jnp.concatenate([Hrep, enc], axis=2)                                   # (B,T,2H)
    energy = jnp.tanh(jnp.einsum("btk,hk->bth", cat, W) + b)                     # (B,T,H)
    score = jnp.einsum("bth,h->bt", energy, v)                                   # (B,T)
    return jax.nn.softmax(score, axis=1)[:, None, :]                             # (B,1,T)


if __name__ == "__main__":
    key = jax.random.PRNGKey(0)
    k_hid, k_enc, k_w, k_b, k_v, k_hid2, k_enc2 = jax.random.split(key, 7)

    # --- case 1: module-sized small shapes (B=2, T=8, H=32) -------------------
    B, T, H = 2, 8, 32
    hidden = jax.random.normal(k_hid, (B, H), dtype=jnp.float32)
    encoder_outputs = jax.random.normal(k_enc, (T, B, H), dtype=jnp.float32)

    lin_bound = 1.0 / math.sqrt(2 * H)
    W = jax.random.uniform(k_w, (H, 2 * H), jnp.float32, -lin_bound, lin_bound)
    b = jax.random.uniform(k_b, (H,), jnp.float32, -lin_bound, lin_bound)
    stdv = 1.0 / math.sqrt(H)
    v = jax.random.normal(k_v, (H,), dtype=jnp.float32) * stdv

    out = jax.block_until_ready(attn_forward(hidden, encoder_outputs, W, b, v))
    ref = attn_reference(hidden, encoder_outputs, W, b, v)
    assert out.shape == (B, 1, T)
    assert jnp.allclose(out, ref, atol=1e-5, rtol=1e-4), "f32 small-shape mismatch"

    # --- case 2: multi-block T (streamed blocks + fused masked softmax) --------
    B2, T2 = 4, 200
    hidden2 = jax.random.normal(k_hid2, (B2, H), dtype=jnp.float32)
    encoder_outputs2 = jax.random.normal(k_enc2, (T2, B2, H), dtype=jnp.float32)
    out2 = jax.block_until_ready(
        attn_forward(hidden2, encoder_outputs2, W, b, v, t_tile=128))
    ref2 = attn_reference(hidden2, encoder_outputs2, W, b, v)
    assert out2.shape == (B2, 1, T2)
    assert jnp.allclose(out2, ref2, atol=1e-5, rtol=1e-4), "tiled-T mismatch"

    # --- case 3: bf16 streaming path (inputs already bf16 -> no wrapper recast) -
    out_bf16 = jax.block_until_ready(
        attn_forward(hidden.astype(jnp.bfloat16),
                     encoder_outputs.astype(jnp.bfloat16), W, b, v))
    assert out_bf16.shape == (B, 1, T)
    assert jnp.allclose(jnp.sum(out_bf16, axis=-1), 1.0, atol=1e-3)
    assert jnp.allclose(out_bf16, ref, atol=0.1), "bf16 path sanity check"

    print("KERNEL_OK")
</pallas_src>

<mosaic_0001>
module attributes {stable_mosaic.version = 11 : i64} {
  func.func @_attn_fused_kernel(%arg0: i32, %arg1: i32, %arg2: memref<2x32xf32, #tpu.memory_space<vmem>>, %arg3: memref<128x2x32xf32, #tpu.memory_space<vmem>>, %arg4: memref<32x32xf32, #tpu.memory_space<vmem>>, %arg5: memref<32x32xf32, #tpu.memory_space<vmem>>, %arg6: memref<1x32xf32, #tpu.memory_space<vmem>>, %arg7: memref<1x32xf32, #tpu.memory_space<vmem>>, %arg8: memref<2x128xf32, #tpu.memory_space<vmem>>, %arg9: memref<2x32xf32, #tpu.memory_space<vmem>>, %arg10: memref<128x2xf32, #tpu.memory_space<vmem>>) attributes {dimension_semantics = [#tpu.dimension_semantics<parallel>, #tpu.dimension_semantics<arbitrary>], iteration_bounds = array<i64: 1, 1>, scalar_prefetch = 0 : i64, scratch_operands = 2 : i64, tpu.core_type = #tpu.core_type<tc>, window_params = [{transform_indices = @transform_0, window_bounds = array<i64: 2, 32>}, {transform_indices = @transform_1, window_bounds = array<i64: 128, 2, 32>}, {pipeline_mode = #tpu.pipeline_mode<synchronous>, transform_indices = @transform_2, window_bounds = array<i64: 32, 32>}, {pipeline_mode = #tpu.pipeline_mode<synchronous>, transform_indices = @transform_3, window_bounds = array<i64: 32, 32>}, {pipeline_mode = #tpu.pipeline_mode<synchronous>, transform_indices = @transform_4, window_bounds = array<i64: 1, 32>}, {pipeline_mode = #tpu.pipeline_mode<synchronous>, transform_indices = @transform_5, window_bounds = array<i64: 1, 32>}, {transform_indices = @transform_6, window_bounds = array<i64: 2, 128>}]} {
    %c0_i32 = arith.constant 0 : i32
    %0 = arith.cmpi eq, %arg1, %c0_i32 : i32
    %1 = arith.extui %0 : i1 to i32
    %c0_i32_0 = arith.constant 0 : i32
    %2 = arith.cmpi ne, %1, %c0_i32_0 : i32
    scf.if %2 {
      %c0_13 = arith.constant 0 : index
      %c0_14 = arith.constant 0 : index
      %25 = vector.load %arg2[%c0_13, %c0_14] : memref<2x32xf32, #tpu.memory_space<vmem>>, vector<2x32xf32>
      %c0_15 = arith.constant 0 : index
      %c0_16 = arith.constant 0 : index
      %26 = vector.load %arg4[%c0_15, %c0_16] : memref<32x32xf32, #tpu.memory_space<vmem>>, vector<32x32xf32>
      %cst_17 = arith.constant dense<0.000000e+00> : vector<2x32xf32>
      %27 = tpu.matmul %25, %26, %cst_17 {dimension_numbers = #tpu.dot_dimension_numbers<[1], [0], [0], [1], [0, 0, 1, 1], [], []>} : vector<2x32xf32>, vector<32x32xf32>, vector<2x32xf32> -> vector<2x32xf32>
      %c0_18 = arith.constant 0 : index
      %c0_19 = arith.constant 0 : index
      %28 = vector.load %arg6[%c0_18, %c0_19] : memref<1x32xf32, #tpu.memory_space<vmem>>, vector<1x32xf32>
      %29 = vector.broadcast %28 : vector<1x32xf32> to vector<2x32xf32>
      %30 = arith.addf %27, %29 : vector<2x32xf32>
      %c0_20 = arith.constant 0 : index
      %c0_21 = arith.constant 0 : index
      %31 = vector.load %arg9[%c0_20, %c0_21] : memref<2x32xf32, #tpu.memory_space<vmem>>, vector<2x32xf32>
      tpu.vector_store %arg9[%c0_20, %c0_21], %30 {strides = array<i32>} : memref<2x32xf32, #tpu.memory_space<vmem>>, vector<2x32xf32>,
    } else {
    }
    %c0 = arith.constant 0 : index
    %c0_1 = arith.constant 0 : index
    %c0_2 = arith.constant 0 : index
    %3 = vector.load %arg3[%c0, %c0_1, %c0_2] : memref<128x2x32xf32, #tpu.memory_space<vmem>>, vector<128x2x32xf32>
    %4 = vector.shape_cast %3 : vector<128x2x32xf32> to vector<256x32xf32>
    %c0_3 = arith.constant 0 : index
    %c0_4 = arith.constant 0 : index
    %5 = vector.load %arg5[%c0_3, %c0_4] : memref<32x32xf32, #tpu.memory_space<vmem>>, vector<32x32xf32>
    %cst = arith.constant dense<0.000000e+00> : vector<256x32xf32>
    %6 = tpu.matmul %4, %5, %cst {dimension_numbers = #tpu.dot_dimension_numbers<[1], [0], [0], [1], [0, 0, 1, 1], [], []>} : vector<256x32xf32>, vector<32x32xf32>, vector<256x32xf32> -> vector<256x32xf32>
    %7 = vector.shape_cast %6 : vector<256x32xf32> to vector<128x2x32xf32>
    %c0_5 = arith.constant 0 : index
    %c0_6 = arith.constant 0 : index
    %8 = vector.load %arg9[%c0_5, %c0_6] : memref<2x32xf32, #tpu.memory_space<vmem>>, vector<2x32xf32>
    %9 = vector.shape_cast %8 : vector<2x32xf32> to vector<1x2x32xf32>
    %10 = vector.broadcast %9 : vector<1x2x32xf32> to vector<128x2x32xf32>
    %11 = arith.addf %7, %10 : vector<128x2x32xf32>
    %12 = math.tanh %11 : vector<128x2x32xf32>
    %c0_7 = arith.constant 0 : index
    %c0_8 = arith.constant 0 : index
    %13 = vector.load %arg7[%c0_7, %c0_8] : memref<1x32xf32, #tpu.memory_space<vmem>>, vector<1x32xf32>
    %14 = vector.shape_cast %13 : vector<1x32xf32> to vector<1x1x32xf32>
    %15 = vector.broadcast %14 : vector<1x1x32xf32> to vector<128x2x32xf32>
    %16 = arith.mulf %12, %15 : vector<128x2x32xf32>
    %cst_9 = arith.constant dense<0.000000e+00> : vector<128x2xf32>
    %17 = vector.multi_reduction <add>, %16, %cst_9 [2] : vector<128x2x32xf32> to vector<128x2xf32>
    %c128_i32 = arith.constant 128 : i32
    %18 = arith.muli %arg1, %c128_i32 : i32
    %19 = tpu.assume_multiple %18, 128 : i32
    %20 = arith.index_cast %19 : i32 to index
    %c0_10 = arith.constant 0 : index
    %21 = vector.load %arg10[%20, %c0_10] : memref<128x2xf32, #tpu.memory_space<vmem>>, vector<128x2xf32>
    tpu.vector_store %arg10[%20, %c0_10], %17 {strides = array<i32>} : memref<128x2xf32, #tpu.memory_space<vmem>>, vector<128x2xf32>,
    %c0_i32_11 = arith.constant 0 : i32
    %22 = arith.cmpi eq, %arg1, %c0_i32_11 : i32
    %23 = arith.extui %22 : i1 to i32
    %c0_i32_12 = arith.constant 0 : i32
    %24 = arith.cmpi ne, %23, %c0_i32_12 : i32
    scf.if %24 {
      %c0_13 = arith.constant 0 : index
      %c0_14 = arith.constant 0 : index
      %25 = vector.load %arg10[%c0_13, %c0_14] : memref<128x2xf32, #tpu.memory_space<vmem>>, vector<128x2xf32>
      %26 = tpu.transpose %25, [1, 0] : vector<128x2xf32> -> vector<2x128xf32>
      %27 = tpu.iota {dimensions = array<i32: 1>} : vector<2x128xi32>
      %c8_i32 = arith.constant 8 : i32
      %28 = vector.broadcast %c8_i32 : i32 to vector<2x128xi32>
      %29 = arith.cmpi slt, %27, %28 : vector<2x128xi32>
      %cst_15 = arith.constant 0xFF800000 : f32
      %30 = vector.broadcast %cst_15 : f32 to vector<2x128xf32>
      %31 = arith.select %29, %26, %30 : vector<2x128xi1>, vector<2x128xf32>
      %cst_16 = arith.constant dense<0xFF800000> : vector<2xf32>
      %32 = vector.multi_reduction <maximumf>, %31, %cst_16 [1] : vector<2x128xf32> to vector<2xf32>
      %33 = vector.shape_cast %32 : vector<2xf32> to vector<2x1xf32>
      %34 = vector.broadcast %33 : vector<2x1xf32> to vector<2x128xf32>
      %35 = arith.subf %31, %34 : vector<2x128xf32>
      %36 = math.exp %35 : vector<2x128xf32>
      %cst_17 = arith.constant dense<0.000000e+00> : vector<2xf32>
      %37 = vector.multi_reduction <add>, %36, %cst_17 [1] : vector<2x128xf32> to vector<2xf32>
      %38 = vector.shape_cast %37 : vector<2xf32> to vector<2x1xf32>
      %39 = vector.broadcast %38 : vector<2x1xf32> to vector<2x128xf32>
      %40 = arith.divf %36, %39 : vector<2x128xf32>
      %c0_18 = arith.constant 0 : index
      %c0_19 = arith.constant 0 : index
      %41 = vector.load %arg8[%c0_18, %c0_19] : memref<2x128xf32, #tpu.memory_space<vmem>>, vector<2x128xf32>
      tpu.vector_store %arg8[%c0_18, %c0_19], %40 {strides = array<i32>} : memref<2x128xf32, #tpu.memory_space<vmem>>, vector<2x128xf32>,
    } else {
    }
    return
  }
  func.func @transform_0(%arg0: i32, %arg1: i32) -> (i32, i32) {
    %c0_i32 = arith.constant 0 : i32
    %c0_i32_0 = arith.constant 0 : i32
    return %arg0, %c0_i32 : i32, i32
  }
  func.func @transform_1(%arg0: i32, %arg1: i32) -> (i32, i32, i32) {
    %c0_i32 = arith.constant 0 : i32
    %c0_i32_0 = arith.constant 0 : i32
    return %arg1, %arg0, %c0_i32 : i32, i32, i32
  }
  func.func @transform_2(%arg0: i32, %arg1: i32) -> (i32, i32) {
    %c0_i32 = arith.constant 0 : i32
    %c0_i32_0 = arith.constant 0 : i32
    %c0_i32_1 = arith.constant 0 : i32
    return %c0_i32, %c0_i32_0 : i32, i32
  }
  func.func @transform_3(%arg0: i32, %arg1: i32) -> (i32, i32) {
    %c0_i32 = arith.constant 0 : i32
    %c0_i32_0 = arith.constant 0 : i32
    %c0_i32_1 = arith.constant 0 : i32
    return %c0_i32, %c0_i32_0 : i32, i32
  }
  func.func @transform_4(%arg0: i32, %arg1: i32) -> (i32, i32) {
    %c0_i32 = arith.constant 0 : i32
    %c0_i32_0 = arith.constant 0 : i32
    %c0_i32_1 = arith.constant 0 : i32
    return %c0_i32, %c0_i32_0 : i32, i32
  }
  func.func @transform_5(%arg0: i32, %arg1: i32) -> (i32, i32) {
    %c0_i32 = arith.constant 0 : i32
    %c0_i32_0 = arith.constant 0 : i32
    %c0_i32_1 = arith.constant 0 : i32
    return %c0_i32, %c0_i32_0 : i32, i32
  }
  func.func @transform_6(%arg0: i32, %arg1: i32) -> (i32, i32) {
    %c0_i32 = arith.constant 0 : i32
    %c0_i32_0 = arith.constant 0 : i32
    return %arg0, %c0_i32 : i32, i32
  }
}

</mosaic_0001>

<llo_original>
// kernel: tpu_custom_call.1
$region0: #{tpu_custom_call.1}
  #allocation0 [shape = 'u32[]', space=smem, size = 0x4, offset = 0x4, fixed_abs, tag = 'smem constant byte address 0x4 - core index']
  #allocation1 [shape = 'u32[144,128]{1,0:T(1,128)}', space=vmem, size = 0x12000, scoped, tag = 'internal scratch']
  #allocation2 [shape = 'f32[2,32]{1,0:T(2,128)}', space=vmem, size = 0x400, scoped, tag = 'scratch operand']
  #allocation3 [shape = 'f32[128,2]{1,0:T(8,128)}', space=vmem, size = 0x10000, scoped, tag = 'scratch operand']
  %s0 = inlined_call_operand.hbm [shape: f32[2,32], index: 0, kind: input, shape index: {}]
  %s1 = inlined_call_operand.hbm [shape: f32[8,2,32], index: 1, kind: input, shape index: {}]
  %s2 = inlined_call_operand.hbm [shape: f32[32,32], index: 2, kind: input, shape index: {}]
  %s3 = inlined_call_operand.hbm [shape: f32[32,32], index: 3, kind: input, shape index: {}]
  %s4 = inlined_call_operand.vmem [shape: f32[1,32], index: 4, kind: input, shape index: {}]
  %s5 = inlined_call_operand.vmem [shape: f32[1,32], index: 5, kind: input, shape index: {}]
  %s6 = inlined_call_operand.hbm [shape: f32[2,8], index: 6, kind: output, shape index: {}]
  %s7 = sld [smem:[#allocation0]]
  $region58: #{tpu_custom_call.1} parent=0
    _
  %s9 = ssub.s32 1, %s7
  %s10 = scalar_select 0, %s9, %s7
  $region1: #{tpu_custom_call.1} parent=0
    #allocation4 [shape = 'u8[1024]{0}', space=vmem, size = 0x400, scoped, tag = 'input window, operand 0, single buffered']
    #allocation5 [shape = 's32[1]{0}', space=sflag, size = 0x4, scoped, tag = 'scoped memory for tpu_custom_call.1']
    #allocation6 [shape = 's32[1]{0}', space=sflag, size = 0x4, scoped, tag = 'scoped memory for tpu_custom_call.1']
    #allocation7 [shape = 'u8[131072]{0}', space=vmem, size = 0x20000, scoped, tag = 'input window, operand 1, single buffered']
    #allocation8 [shape = 's32[1]{0}', space=sflag, size = 0x4, scoped, tag = 'scoped memory for tpu_custom_call.1']
    #allocation9 [shape = 'u8[16384]{0}', space=vmem, size = 0x4000, scoped, tag = 'input window, operand 2, single buffered']
    #allocation10 [shape = 'u8[16384]{0}', space=vmem, size = 0x4000, scoped, tag = 'input window, operand 3, single buffered']
    #allocation11 [shape = 's32[1]{0}', space=sflag, size = 0x4, scoped, tag = 'scoped memory for tpu_custom_call.1']
    #allocation12 [shape = 'u8[1024]{0}', space=vmem, size = 0x400, scoped, tag = 'output window, operand 0, single buffered']
    %11 = vsyncpa [#allocation5], 0
    %12 = vsyncpa [#allocation8], 0
    %13 = vsyncpa [#allocation11], 0
    %14 = vsyncpa [#allocation6], 0
    // Predicated region
    $region2: #{tpu_custom_call.1} parent=1 // pred_check
      _
    $region3: #{tpu_custom_call.1} parent=1 // pred_check_branch
      %16 = sbr.rel (0) target = $region5
    $region4: #{tpu_custom_call.1} parent=1 // pred_region
      %s18 = ssub.s32 32, 32
      %19 = vsyncadd [#allocation5], %s18
      %s21 = sshll.u32 [#allocation4], 4
      %s22 = int_to_ptr.vmem [resolvable:$true] %s21
      %24 = dma.hbm_to_vmem [thread:$0]  %s0, 32, %s22, [#allocation5]
    $region5: #{tpu_custom_call.1} parent=1 // pred_fallthru
      _
    // Predicated region
    $region6: #{tpu_custom_call.1} parent=1 // pred_check
      _
    $region7: #{tpu_custom_call.1} parent=1 // pred_check_branch
      %26 = sbr.rel (0) target = $region9
    $region8: #{tpu_custom_call.1} parent=1 // pred_region
      %s28 = ssub.s32 4096, 256
      %29 = vsyncadd [#allocation8], %s28
      %s30 = sshll.u32 [#allocation7], 4
      %s31 = int_to_ptr.vmem [resolvable:$true] %s30
      %36 = dma.hbm_to_vmem [thread:$0]  %s1, 256, %s31, [#allocation8], 32, 32, 2
    $region9: #{tpu_custom_call.1} parent=1 // pred_fallthru
      _
    // Predicated region
    $region10: #{tpu_custom_call.1} parent=1 // pred_check
      _
    $region11: #{tpu_custom_call.1} parent=1 // pred_check_branch
      %38 = sbr.rel (0) target = $region13
    $region12: #{tpu_custom_call.1} parent=1 // pred_region
      %s40 = ssub.s32 512, 512
      %41 = vsyncadd [#allocation8], %s40
      %s42 = sshll.u32 [#allocation9], 4
      %s43 = int_to_ptr.vmem [resolvable:$true] %s42
      %48 = dma.hbm_to_vmem [thread:$0]  %s2, 512, %s43, [#allocation8], 128, 128, 8
    $region13: #{tpu_custom_call.1} parent=1 // pred_fallthru
      _
    // Predicated region
    $region14: #{tpu_custom_call.1} parent=1 // pred_check
      _
    $region15: #{tpu_custom_call.1} parent=1 // pred_check_branch
      %50 = sbr.rel (0) target = $region17
    $region16: #{tpu_custom_call.1} parent=1 // pred_region
      %s52 = ssub.s32 512, 512
      %53 = vsyncadd [#allocation11], %s52
      %s54 = sshll.u32 [#allocation10], 4
      %s55 = int_to_ptr.vmem [resolvable:$true] %s54
      %60 = dma.hbm_to_vmem [thread:$0]  %s3, 512, %s55, [#allocation11], 128, 128, 8
    $region17: #{tpu_custom_call.1} parent=1 // pred_fallthru
      _
    // Predicated region
    $region18: #{tpu_custom_call.1} parent=1 // pred_check
      _
    $region19: #{tpu_custom_call.1} parent=1 // pred_check_branch
      %62 = sbr.rel (0) target = $region21
    $region20: #{tpu_custom_call.1} parent=1 // pred_region
      _
    $region21: #{tpu_custom_call.1} parent=1 // pred_fallthru
      _
    // Predicated region
    $region22: #{tpu_custom_call.1} parent=1 // pred_check
      _
    $region23: #{tpu_custom_call.1} parent=1 // pred_check_branch
      %64 = sbr.rel (0) target = $region25
    $region24: #{tpu_custom_call.1} parent=1 // pred_region
      _
    $region25: #{tpu_custom_call.1} parent=1 // pred_fallthru
      _
    // Predicated region
    $region26: #{tpu_custom_call.1} parent=1 // pred_check
      _
    $region27: #{tpu_custom_call.1} parent=1 // pred_check_branch
      %66 = sbr.rel (0) target = $region29
    $region28: #{tpu_custom_call.1} parent=1 // pred_region
      %67 = dma.done [#allocation5], 32
    $region29: #{tpu_custom_call.1} parent=1 // pred_fallthru
      _
    // Predicated region
    $region30: #{tpu_custom_call.1} parent=1 // pred_check
      _
    $region31: #{tpu_custom_call.1} parent=1 // pred_check_branch
      %69 = sbr.rel (0) target = $region33
    $region32: #{tpu_custom_call.1} parent=1 // pred_region
      %70 = dma.done [#allocation8], 4096
    $region33: #{tpu_custom_call.1} parent=1 // pred_fallthru
      _
    // Predicated region
    $region34: #{tpu_custom_call.1} parent=1 // pred_check
      _
    $region35: #{tpu_custom_call.1} parent=1 // pred_check_branch
      %72 = sbr.rel (0) target = $region37
    $region36: #{tpu_custom_call.1} parent=1 // pred_region
      %73 = dma.done [#allocation8], 512
    $region37: #{tpu_custom_call.1} parent=1 // pred_fallthru
      _
    // Predicated region
    $region38: #{tpu_custom_call.1} parent=1 // pred_check
      _
    $region39: #{tpu_custom_call.1} parent=1 // pred_check_branch
      %75 = sbr.rel (0) target = $region41
    $region40: #{tpu_custom_call.1} parent=1 // pred_region
      %76 = dma.done [#allocation11], 512
    $region41: #{tpu_custom_call.1} parent=1 // pred_fallthru
      _
    %p77 = scmp.eq.s32.totalorder 0, 0
    // Predicated region
    $region42: #{tpu_custom_call.1} parent=1 // pred_check
      %p78 = pneg %p77
    $region43: #{tpu_custom_call.1} parent=1 // pred_check_branch
      %80 = sbr.rel (%p78) target = $region45
    $region44: #{tpu_custom_call.1} parent=1 // pred_region
      %v81 = vld [vmem:[#allocation4] sm:$0x3]
      %v82 = vld [vmem:[#allocation9] sm:$0xff]
      %v83 = vld [vmem:[#allocation9 + $0x8] sm:$0xff]
      %v84 = vld [vmem:[#allocation9 + $0x10] sm:$0xff]
      %v85 = vld [vmem:[#allocation9 + $0x18] sm:$0xff]
      %v86 = vld [vmem:[%s4] sm:$0x1]
      %v88 = vlaneseq
      %v89 = vshrl.u32 %v88, 7
      %v90 = vsub.s32 0, %v89
      %v91 = vrot.slane %v86, %v90
      %vm93 = vcmask 261120
      %v95 = vsel %vm93, %v81, 0
      %97 = vmatprep.subr.mxu0 0.0
      %98 = vmatpush1.msra.mxu0 0.0
      %99 = vmatprep.subr.mxu0 0.0
      %100 = vmatpush1.msra.mxu0 0.0
      %101 = vmatprep.subr.mxu0 0.0
      %102 = vmatpush1.msra.mxu0 0.0
      %103 = vmatprep.subr.mxu0 0.0
      %104 = vmatpush1.msra.mxu0 0.0
      %105 = vmatprep.subr.mxu0 0.0
      %106 = vmatpush1.msra.mxu0 0.0
      %107 = vmatprep.subr.mxu0 0.0
      %108 = vmatpush1.msra.mxu0 0.0
      %109 = vmatprep.subr.mxu0 0.0
      %110 = vmatpush1.msra.mxu0 0.0
      %111 = vmatprep.subr.mxu0 0.0
      %112 = vmatpush1.msra.mxu0 0.0
      %113 = vmatprep.subr.mxu0 0.0
      %114 = vmatpush1.msra.mxu0 0.0
      %115 = vmatprep.subr.mxu0 0.0
      %116 = vmatpush1.msra.mxu0 0.0
      %117 = vmatprep.subr.mxu0 0.0
      %118 = vmatpush1.msra.mxu0 0.0
      %119 = vmatprep.subr.mxu0 0.0
      %120 = vmatpush1.msra.mxu0 0.0
      %121 = vmatprep.subr.mxu0 0.0
      %122 = vmatpush1.msra.mxu0 %v85
      %123 = vmatprep.subr.mxu0 0.0
      %124 = vmatpush1.msra.mxu0 %v84
      %125 = vmatprep.subr.mxu0 0.0
      %126 = vmatpush1.msra.mxu0 %v83
      %127 = vmatprep.subr.mxu0 0.0
      %128 = vmatpush1.msra.mxu0 %v82
      %129 = vmatprep.subr.mxu0 0.0
      %130 = vmatpush2.msra.mxu0 0.0
      %131 = vmatprep.subr.mxu0 0.0
      %132 = vmatpush2.msra.mxu0 0.0
      %133 = vmatprep.subr.mxu0 0.0
      %134 = vmatpush2.msra.mxu0 0.0
      %135 = vmatprep.subr.mxu0 0.0
      %136 = vmatpush2.msra.mxu0 0.0
      %137 = vmatprep.subr.mxu0 0.0
      %138 = vmatpush2.msra.mxu0 0.0
      %139 = vmatprep.subr.mxu0 0.0
      %140 = vmatpush2.msra.mxu0 0.0
      %141 = vmatprep.subr.mxu0 0.0
      %142 = vmatpush2.msra.mxu0 0.0
      %143 = vmatprep.subr.mxu0 0.0
      %144 = vmatpush2.msra.mxu0 0.0
      %145 = vmatprep.subr.mxu0 0.0
      %146 = vmatpush2.msra.mxu0 0.0
      %147 = vmatprep.subr.mxu0 0.0
      %148 = vmatpush2.msra.mxu0 0.0
      %149 = vmatprep.subr.mxu0 0.0
      %150 = vmatpush2.msra.mxu0 0.0
      %151 = vmatprep.subr.mxu0 0.0
      %152 = vmatpush2.msra.mxu0 0.0
      %153 = vmatprep.subr.mxu0 0.0
      %154 = vmatpush2.msra.mxu0 0.0
      %155 = vmatprep.subr.mxu0 0.0
      %156 = vmatpush2.msra.mxu0 0.0
      %157 = vmatprep.subr.mxu0 0.0
      %158 = vmatpush2.msra.mxu0 0.0
      %159 = vmatprep.subr.mxu0 0.0
      %160 = vmatpush2.msra.mxu0 0.0
      %161 = vmatprep.mubr.f32.mxu0 0.0
      %162 = vmatmul.mubr.f32.gmra.mxu0 %v95
      %v163 = vpop.f32.mrf.mxu0
      %v164 = vadd.f32 %v91, %v163
      %v165 = vpop.f32.mrf.mxu0
      %166 = vdwg.mxu0
      %vm167 = vcmask 254976
      %168 = vst.msk [vmem:[#allocation2] sm:$0x3] %vm167, %v164
    $region45: #{tpu_custom_call.1} parent=1 // pred_fallthru
      _
    %v169 = vld [vmem:[#allocation7] sm:$0x3]
    %v170 = vld [vmem:[#allocation7 + $0x2] sm:$0x3]
    %v171 = vld [vmem:[#allocation7 + $0x4] sm:$0x3]
    %v172 = vld [vmem:[#allocation7 + $0x6] sm:$0x3]
    %v173 = vld [vmem:[#allocation7 + $0x8] sm:$0x3]
    %v174 = vld [vmem:[#allocation7 + $0xa] sm:$0x3]
    %v175 = vld [vmem:[#allocation7 + $0xc] sm:$0x3]
    %v176 = vld [vmem:[#allocation7 + $0xe] sm:$0x3]
    %v177 = vld [vmem:[#allocation7 + $0x10] sm:$0x3]
    %v178 = vld [vmem:[#allocation7 + $0x12] sm:$0x3]
    %v179 = vld [vmem:[#allocation7 + $0x14] sm:$0x3]
    %v180 = vld [vmem:[#allocation7 + $0x16] sm:$0x3]
    %v181 = vld [vmem:[#allocation7 + $0x18] sm:$0x3]
    %v182 = vld [vmem:[#allocation7 + $0x1a] sm:$0x3]
    %v183 = vld [vmem:[#allocation7 + $0x1c] sm:$0x3]
    %v184 = vld [vmem:[#allocation7 + $0x1e] sm:$0x3]
    %v185 = vld [vmem:[#allocation7 + $0x20] sm:$0x3]
    %v186 = vld [vmem:[#allocation7 + $0x22] sm:$0x3]
    %v187 = vld [vmem:[#allocation7 + $0x24] sm:$0x3]
    %v188 = vld [vmem:[#allocation7 + $0x26] sm:$0x3]
    %v189 = vld [vmem:[#allocation7 + $0x28] sm:$0x3]
    %v190 = vld [vmem:[#allocation7 + $0x2a] sm:$0x3]
    %v191 = vld [vmem:[#allocation7 + $0x2c] sm:$0x3]
    %v192 = vld [vmem:[#allocation7 + $0x2e] sm:$0x3]
    %v193 = vld [vmem:[#allocation7 + $0x30] sm:$0x3]
    %v194 = vld [vmem:[#allocation7 + $0x32] sm:$0x3]
    %v195 = vld [vmem:[#allocation7 + $0x34] sm:$0x3]
    %v196 = vld [vmem:[#allocation7 + $0x36] sm:$0x3]
    %v197 = vld [vmem:[#allocation7 + $0x38] sm:$0x3]
    %v198 = vld [vmem:[#allocation7 + $0x3a] sm:$0x3]
    %v199 = vld [vmem:[#allocation7 + $0x3c] sm:$0x3]
    %v200 = vld [vmem:[#allocation7 + $0x3e] sm:$0x3]
    %v201 = vld [vmem:[#allocation7 + $0x40] sm:$0x3]
    %v202 = vld [vmem:[#allocation7 + $0x42] sm:$0x3]
    %v203 = vld [vmem:[#allocation7 + $0x44] sm:$0x3]
    %v204 = vld [vmem:[#allocation7 + $0x46] sm:$0x3]
    %v205 = vld [vmem:[#allocation7 + $0x48] sm:$0x3]
    %v206 = vld [vmem:[#allocation7 + $0x4a] sm:$0x3]
    %v207 = vld [vmem:[#allocation7 + $0x4c] sm:$0x3]
    %v208 = vld [vmem:[#allocation7 + $0x4e] sm:$0x3]
    %v209 = vld [vmem:[#allocation7 + $0x50] sm:$0x3]
    %v210 = vld [vmem:[#allocation7 + $0x52] sm:$0x3]
    %v211 = vld [vmem:[#allocation7 + $0x54] sm:$0x3]
    %v212 = vld [vmem:[#allocation7 + $0x56] sm:$0x3]
    %v213 = vld [vmem:[#allocation7 + $0x58] sm:$0x3]
    %v214 = vld [vmem:[#allocation7 + $0x5a] sm:$0x3]
    %v215 = vld [vmem:[#allocation7 + $0x5c] sm:$0x3]
    %v216 = vld [vmem:[#allocation7 + $0x5e] sm:$0x3]
    %v217 = vld [vmem:[#allocation7 + $0x60] sm:$0x3]
    %v218 = vld [vmem:[#allocation7 + $0x62] sm:$0x3]
    %v219 = vld [vmem:[#allocation7 + $0x64] sm:$0x3]
    %v220 = vld [vmem:[#allocation7 + $0x66] sm:$0x3]
    %v221 = vld [vmem:[#allocation7 + $0x68] sm:$0x3]
    %v222 = vld [vmem:[#allocation7 + $0x6a] sm:$0x3]
    %v223 = vld [vmem:[#allocation7 + $0x6c] sm:$0x3]
    %v224 = vld [vmem:[#allocation7 + $0x6e] sm:$0x3]
    %v225 = vld [vmem:[#allocation7 + $0x70] sm:$0x3]
    %v226 = vld [vmem:[#allocation7 + $0x72] sm:$0x3]
    %v227 = vld [vmem:[#allocation7 + $0x74] sm:$0x3]
    %v228 = vld [vmem:[#allocation7 + $0x76] sm:$0x3]
    %v229 = vld [vmem:[#allocation7 + $0x78] sm:$0x3]
    %v230 = vld [vmem:[#allocation7 + $0x7a] sm:$0x3]
    %v231 = vld [vmem:[#allocation7 + $0x7c] sm:$0x3]
    %v232 = vld [vmem:[#allocation7 + $0x7e] sm:$0x3]
    %v233 = vld [vmem:[#allocation7 + $0x80] sm:$0x3]
    %v234 = vld [vmem:[#allocation7 + $0x82] sm:$0x3]
    %v235 = vld [vmem:[#allocation7 + $0x84] sm:$0x3]
    %v236 = vld [vmem:[#allocation7 + $0x86] sm:$0x3]
    %v237 = vld [vmem:[#allocation7 + $0x88] sm:$0x3]
    %v238 = vld [vmem:[#allocation7 + $0x8a] sm:$0x3]
    %v239 = vld [vmem:[#allocation7 + $0x8c] sm:$0x3]
    %v240 = vld [vmem:[#allocation7 + $0x8e] sm:$0x3]
    %v241 = vld [vmem:[#allocation7 + $0x90] sm:$0x3]
    %v242 = vld [vmem:[#allocation7 + $0x92] sm:$0x3]
    %v243 = vld [vmem:[#allocation7 + $0x94] sm:$0x3]
    %v244 = vld [vmem:[#allocation7 + $0x96] sm:$0x3]
    %v245 = vld [vmem:[#allocation7 + $0x98] sm:$0x3]
    %v246 = vld [vmem:[#allocation7 + $0x9a] sm:$0x3]
    %v247 = vld [vmem:[#allocation7 + $0x9c] sm:$0x3]
    %v248 = vld [vmem:[#allocation7 + $0x9e] sm:$0x3]
    %v249 = vld [vmem:[#allocation7 + $0xa0] sm:$0x3]
    %v250 = vld [vmem:[#allocation7 + $0xa2] sm:$0x3]
    %v251 = vld [vmem:[#allocation7 + $0xa4] sm:$0x3]
    %v252 = vld [vmem:[#allocation7 + $0xa6] sm:$0x3]
    %v253 = vld [vmem:[#allocation7 + $0xa8] sm:$0x3]
    %v254 = vld [vmem:[#allocation7 + $0xaa] sm:$0x3]
    %v255 = vld [vmem:[#allocation7 + $0xac] sm:$0x3]
    %v256 = vld [vmem:[#allocation7 + $0xae] sm:$0x3]
    %v257 = vld [vmem:[#allocation7 + $0xb0] sm:$0x3]
    %v258 = vld [vmem:[#allocation7 + $0xb2] sm:$0x3]
    %v259 = vld [vmem:[#allocation7 + $0xb4] sm:$0x3]
    %v260 = vld [vmem:[#allocation7 + $0xb6] sm:$0x3]
    %v261 = vld [vmem:[#allocation7 + $0xb8] sm:$0x3]
    %v262 = vld [vmem:[#allocation7 + $0xba] sm:$0x3]
    %v263 = vld [vmem:[#allocation7 + $0xbc] sm:$0x3]
    %v264 = vld [vmem:[#allocation7 + $0xbe] sm:$0x3]
    %v265 = vld [vmem:[#allocation7 + $0xc0] sm:$0x3]
    %v266 = vld [vmem:[#allocation7 + $0xc2] sm:$0x3]
    %v267 = vld [vmem:[#allocation7 + $0xc4] sm:$0x3]
    %v268 = vld [vmem:[#allocation7 + $0xc6] sm:$0x3]
    %v269 = vld [vmem:[#allocation7 + $0xc8] sm:$0x3]
    %v270 = vld [vmem:[#allocation7 + $0xca] sm:$0x3]
    %v271 = vld [vmem:[#allocation7 + $0xcc] sm:$0x3]
    %v272 = vld [vmem:[#allocation7 + $0xce] sm:$0x3]
    %v273 = vld [vmem:[#allocation7 + $0xd0] sm:$0x3]
    %v274 = vld [vmem:[#allocation7 + $0xd2] sm:$0x3]
    %v275 = vld [vmem:[#allocation7 + $0xd4] sm:$0x3]
    %v276 = vld [vmem:[#allocation7 + $0xd6] sm:$0x3]
    %v277 = vld [vmem:[#allocation7 + $0xd8] sm:$0x3]
    %v278 = vld [vmem:[#allocation7 + $0xda] sm:$0x3]
    %v279 = vld [vmem:[#allocation7 + $0xdc] sm:$0x3]
    %v280 = vld [vmem:[#allocation7 + $0xde] sm:$0x3]
    %v281 = vld [vmem:[#allocation7 + $0xe0] sm:$0x3]
    %v282 = vld [vmem:[#allocation7 + $0xe2] sm:$0x3]
    %v283 = vld [vmem:[#allocation7 + $0xe4] sm:$0x3]
    %v284 = vld [vmem:[#allocation7 + $0xe6] sm:$0x3]
    %v285 = vld [vmem:[#allocation7 + $0xe8] sm:$0x3]
    %v286 = vld [vmem:[#allocation7 + $0xea] sm:$0x3]
    %v287 = vld [vmem:[#allocation7 + $0xec] sm:$0x3]
    %v288 = vld [vmem:[#allocation7 + $0xee] sm:$0x3]
    %v289 = vld [vmem:[#allocation7 + $0xf0] sm:$0x3]
    %v290 = vld [vmem:[#allocation7 + $0xf2] sm:$0x3]
    %v291 = vld [vmem:[#allocation7 + $0xf4] sm:$0x3]
    %v292 = vld [vmem:[#allocation7 + $0xf6] sm:$0x3]
    %v293 = vld [vmem:[#allocation7 + $0xf8] sm:$0x3]
    %v294 = vld [vmem:[#allocation7 + $0xfa] sm:$0x3]
    %v295 = vld [vmem:[#allocation7 + $0xfc] sm:$0x3]
    %v296 = vld [vmem:[#allocation7 + $0xfe] sm:$0x3]
    %v297 = vld [vmem:[#allocation10] sm:$0xff]
    %v298 = vld [vmem:[#allocation10 + $0x8] sm:$0xff]
    %v299 = vld [vmem:[#allocation10 + $0x10] sm:$0xff]
    %v300 = vld [vmem:[#allocation10 + $0x18] sm:$0xff]
    %v429 = vcombine.low %v169, %v170
    %v430 = vcombine.low %v171, %v172
    %v432 = vunpack.c.l.s4 1983009808
    %v433 = vunpack.c.0.s8 %v432
    %v434 = vlaneseq
    %v435 = vshrl.u32 %v434, 7
    %v436 = vsub.s32 %v433, %v435
    %v437 = vrot.slane %v429, %v436
    %v439 = vunpack.c.l.s4 1983009808
    %v440 = vunpack.c.0.s8 %v439
    %v441 = vlaneseq
    %v442 = vshrl.u32 %v441, 7
    %v443 = vsub.s32 %v440, %v442
    %v444 = vrot.slane %v430, %v443
    %v445 = vcombine.low %v437, %v444
    %v446 = vcombine.low %v173, %v174
    %v447 = vcombine.low %v175, %v176
    %v449 = vunpack.c.l.s4 1983009808
    %v450 = vunpack.c.0.s8 %v449
    %v451 = vlaneseq
    %v452 = vshrl.u32 %v451, 7
    %v453 = vsub.s32 %v450, %v452
    %v454 = vrot.slane %v446, %v453
    %v456 = vunpack.c.l.s4 1983009808
    %v457 = vunpack.c.0.s8 %v456
    %v458 = vlaneseq
    %v459 = vshrl.u32 %v458, 7
    %v460 = vsub.s32 %v457, %v459
    %v461 = vrot.slane %v447, %v460
    %v462 = vcombine.low %v454, %v461
    %v463 = vcombine.low %v177, %v178
    %v464 = vcombine.low %v179, %v180
    %v466 = vunpack.c.l.s4 1983009808
    %v467 = vunpack.c.0.s8 %v466
    %v468 = vlaneseq
    %v469 = vshrl.u32 %v468, 7
    %v470 = vsub.s32 %v467, %v469
    %v471 = vrot.slane %v463, %v470
    %v473 = vunpack.c.l.s4 1983009808
    %v474 = vunpack.c.0.s8 %v473
    %v475 = vlaneseq
    %v476 = vshrl.u32 %v475, 7
    %v477 = vsub.s32 %v474, %v476
    %v478 = vrot.slane %v464, %v477
    %v479 = vcombine.low %v471, %v478
    %v480 = vcombine.low %v181, %v182
    %v481 = vcombine.low %v183, %v184
    %v483 = vunpack.c.l.s4 1983009808
    %v484 = vunpack.c.0.s8 %v483
    %v485 = vlaneseq
    %v486 = vshrl.u32 %v485, 7
    %v487 = vsub.s32 %v484, %v486
    %v488 = vrot.slane %v480, %v487
    %v490 = vunpack.c.l.s4 1983009808
    %v491 = vunpack.c.0.s8 %v490
    %v492 = vlaneseq
    %v493 = vshrl.u32 %v492, 7
    %v494 = vsub.s32 %v491, %v493
    %v495 = vrot.slane %v481, %v494
    %v496 = vcombine.low %v488, %v495
    %v497 = vcombine.low %v185, %v186
    %v498 = vcombine.low %v187, %v188
    %v500 = vunpack.c.l.s4 1983009808
    %v501 = vunpack.c.0.s8 %v500
    %v502 = vlaneseq
    %v503 = vshrl.u32 %v502, 7
    %v504 = vsub.s32 %v501, %v503
    %v505 = vrot.slane %v497, %v504
    %v507 = vunpack.c.l.s4 1983009808
    %v508 = vunpack.c.0.s8 %v507
    %v509 = vlaneseq
    %v510 = vshrl.u32 %v509, 7
    %v511 = vsub.s32 %v508, %v510
    %v512 = vrot.slane %v498, %v511
    %v513 = vcombine.low %v505, %v512
    %v514 = vcombine.low %v189, %v190
    %v515 = vcombine.low %v191, %v192
    %v517 = vunpack.c.l.s4 1983009808
    %v518 = vunpack.c.0.s8 %v517
    %v519 = vlaneseq
    %v520 = vshrl.u32 %v519, 7
    %v521 = vsub.s32 %v518, %v520
    %v522 = vrot.slane %v514, %v521
    %v524 = vunpack.c.l.s4 1983009808
    %v525 = vunpack.c.0.s8 %v524
    %v526 = vlaneseq
    %v527 = vshrl.u32 %v526, 7
    %v528 = vsub.s32 %v525, %v527
    %v529 = vrot.slane %v515, %v528
    %v530 = vcombine.low %v522, %v529
    %v531 = vcombine.low %v193, %v194
    %v532 = vcombine.low %v195, %v196
    %v534 = vunpack.c.l.s4 1983009808
    %v535 = vunpack.c.0.s8 %v534
    %v536 = vlaneseq
    %v537 = vshrl.u32 %v536, 7
    %v538 = vsub.s32 %v535, %v537
    %v539 = vrot.slane %v531, %v538
    %v541 = vunpack.c.l.s4 1983009808
    %v542 = vunpack.c.0.s8 %v541
    %v543 = vlaneseq
    %v544 = vshrl.u32 %v543, 7
    %v545 = vsub.s32 %v542, %v544
    %v546 = vrot.slane %v532, %v545
    %v547 = vcombine.low %v539, %v546
    %v548 = vcombine.low %v197, %v198
    %v549 = vcombine.low %v199, %v200
    %v551 = vunpack.c.l.s4 1983009808
    %v552 = vunpack.c.0.s8 %v551
    %v553 = vlaneseq
    %v554 = vshrl.u32 %v553, 7
    %v555 = vsub.s32 %v552, %v554
    %v556 = vrot.slane %v548, %v555
    %v558 = vunpack.c.l.s4 1983009808
    %v559 = vunpack.c.0.s8 %v558
    %v560 = vlaneseq
    %v561 = vshrl.u32 %v560, 7
    %v562 = vsub.s32 %v559, %v561
    %v563 = vrot.slane %v549, %v562
    %v564 = vcombine.low %v556, %v563
    %v565 = vcombine.low %v201, %v202
    %v566 = vcombine.low %v203, %v204
    %v568 = vunpack.c.l.s4 1983009808
    %v569 = vunpack.c.0.s8 %v568
    %v570 = vlaneseq
    %v571 = vshrl.u32 %v570, 7
    %v572 = vsub.s32 %v569, %v571
    %v573 = vrot.slane %v565, %v572
    %v575 = vunpack.c.l.s4 1983009808
    %v576 = vunpack.c.0.s8 %v575
    %v577 = vlaneseq
    %v578 = vshrl.u32 %v577, 7
    %v579 = vsub.s32 %v576, %v578
    %v580 = vrot.slane %v566, %v579
    %v581 = vcombine.low %v573, %v580
    %v582 = vcombine.low %v205, %v206
    %v583 = vcombine.low %v207, %v208
    %v585 = vunpack.c.l.s4 1983009808
    %v586 = vunpack.c.0.s8 %v585
    %v587 = vlaneseq
    %v588 = vshrl.u32 %v587, 7
    %v589 = vsub.s32 %v586, %v588
    %v590 = vrot.slane %v582, %v589
    %v592 = vunpack.c.l.s4 1983009808
    %v593 = vunpack.c.0.s8 %v592
    %v594 = vlaneseq
    %v595 = vshrl.u32 %v594, 7
    %v596 = vsub.s32 %v593, %v595
    %v597 = vrot.slane %v583, %v596
    %v598 = vcombine.low %v590, %v597
    %v599 = vcombine.low %v209, %v210
    %v600 = vcombine.low %v211, %v212
    %v602 = vunpack.c.l.s4 1983009808
    %v603 = vunpack.c.0.s8 %v602
    %v604 = vlaneseq
    %v605 = vshrl.u32 %v604, 7
    %v606 = vsub.s32 %v603, %v605
    %v607 = vrot.slane %v599, %v606
    %v609 = vunpack.c.l.s4 1983009808
    %v610 = vunpack.c.0.s8 %v609
    %v611 = vlaneseq
    %v612 = vshrl.u32 %v611, 7
    %v613 = vsub.s32 %v610, %v612
    %v614 = vrot.slane %v600, %v613
    %v615 = vcombine.low %v607, %v614
    %v616 = vcombine.low %v213, %v214
    %v617 = vcombine.low %v215, %v216
    %v619 = vunpack.c.l.s4 1983009808
    %v620 = vunpack.c.0.s8 %v619
    %v621 = vlaneseq
    %v622 = vshrl.u32 %v621, 7
    %v623 = vsub.s32 %v620, %v622
    %v624 = vrot.slane %v616, %v623
    %v626 = vunpack.c.l.s4 1983009808
    %v627 = vunpack.c.0.s8 %v626
    %v628 = vlaneseq
    %v629 = vshrl.u32 %v628, 7
    %v630 = vsub.s32 %v627, %v629
    %v631 = vrot.slane %v617, %v630
    %v632 = vcombine.low %v624, %v631
    %v633 = vcombine.low %v217, %v218
    %v634 = vcombine.low %v219, %v220
    %v636 = vunpack.c.l.s4 1983009808
    %v637 = vunpack.c.0.s8 %v636
    %v638 = vlaneseq
    %v639 = vshrl.u32 %v638, 7
    %v640 = vsub.s32 %v637, %v639
    %v641 = vrot.slane %v633, %v640
    %v643 = vunpack.c.l.s4 1983009808
    %v644 = vunpack.c.0.s8 %v643
    %v645 = vlaneseq
    %v646 = vshrl.u32 %v645, 7
    %v647 = vsub.s32 %v644, %v646
    %v648 = vrot.slane %v634, %v647
    %v649 = vcombine.low %v641, %v648
    %v650 = vcombine.low %v221, %v222
    %v651 = vcombine.low %v223, %v224
    %v653 = vunpack.c.l.s4 1983009808
    %v654 = vunpack.c.0.s8 %v653
    %v655 = vlaneseq
    %v656 = vshrl.u32 %v655, 7
    %v657 = vsub.s32 %v654, %v656
    %v658 = vrot.slane %v650, %v657
    %v660 = vunpack.c.l.s4 1983009808
    %v661 = vunpack.c.0.s8 %v660
    %v662 = vlaneseq
    %v663 = vshrl.u32 %v662, 7
    %v664 = vsub.s32 %v661, %v663
    %v665 = vrot.slane %v651, %v664
    %v666 = vcombine.low %v658, %v665
    %v667 = vcombine.low %v225, %v226
    %v668 = vcombine.low %v227, %v228
    %v670 = vunpack.c.l.s4 1983009808
    %v671 = vunpack.c.0.s8 %v670
    %v672 = vlaneseq
    %v673 = vshrl.u32 %v672, 7
    %v674 = vsub.s32 %v671, %v673
    %v675 = vrot.slane %v667, %v674
    %v677 = vunpack.c.l.s4 1983009808
    %v678 = vunpack.c.0.s8 %v677
    %v679 = vlaneseq
    %v680 = vshrl.u32 %v679, 7
    %v681 = vsub.s32 %v678, %v680
    %v682 = vrot.slane %v668, %v681
    %v683 = vcombine.low %v675, %v682
    %v684 = vcombine.low %v229, %v230
    %v685 = vcombine.low %v231, %v232
    %v687 = vunpack.c.l.s4 1983009808
    %v688 = vunpack.c.0.s8 %v687
    %v689 = vlaneseq
    %v690 = vshrl.u32 %v689, 7
    %v691 = vsub.s32 %v688, %v690
    %v692 = vrot.slane %v684, %v691
    %v694 = vunpack.c.l.s4 1983009808
    %v695 = vunpack.c.0.s8 %v694
    %v696 = vlaneseq
    %v697 = vshrl.u32 %v696, 7
    %v698 = vsub.s32 %v695, %v697
    %v699 = vrot.slane %v685, %v698
    %v700 = vcombine.low %v692, %v699
    %v701 = vcombine.low %v233, %v234
    %v702 = vcombine.low %v235, %v236
    %v704 = vunpack.c.l.s4 1983009808
    %v705 = vunpack.c.0.s8 %v704
    %v706 = vlaneseq
    %v707 = vshrl.u32 %v706, 7
    %v708 = vsub.s32 %v705, %v707
    %v709 = vrot.slane %v701, %v708
    %v711 = vunpack.c.l.s4 1983009808
    %v712 = vunpack.c.0.s8 %v711
    %v713 = vlaneseq
    %v714 = vshrl.u32 %v713, 7
    %v715 = vsub.s32 %v712, %v714
    %v716 = vrot.slane %v702, %v715
    %v717 = vcombine.low %v709, %v716
    %v718 = vcombine.low %v237, %v238
    %v719 = vcombine.low %v239, %v240
    %v721 = vunpack.c.l.s4 1983009808
    %v722 = vunpack.c.0.s8 %v721
    %v723 = vlaneseq
    %v724 = vshrl.u32 %v723, 7
    %v725 = vsub.s32 %v722, %v724
    %v726 = vrot.slane %v718, %v725
    %v728 = vunpack.c.l.s4 1983009808
    %v729 = vunpack.c.0.s8 %v728
    %v730 = vlaneseq
    %v731 = vshrl.u32 %v730, 7
    %v732 = vsub.s32 %v729, %v731
    %v733 = vrot.slane %v719, %v732
    %v734 = vcombine.low %v726, %v733
    %v735 = vcombine.low %v241, %v242
    %v736 = vcombine.low %v243, %v244
    %v738 = vunpack.c.l.s4 1983009808
    %v739 = vunpack.c.0.s8 %v738
    %v740 = vlaneseq
    %v741 = vshrl.u32 %v740, 7
    %v742 = vsub.s32 %v739, %v741
    %v743 = vrot.slane %v735, %v742
    %v745 = vunpack.c.l.s4 1983009808
    %v746 = vunpack.c.0.s8 %v745
    %v747 = vlaneseq
    %v748 = vshrl.u32 %v747, 7
    %v749 = vsub.s32 %v746, %v748
    %v750 = vrot.slane %v736, %v749
    %v751 = vcombine.low %v743, %v750
    %v752 = vcombine.low %v245, %v246
    %v753 = vcombine.low %v247, %v248
    %v755 = vunpack.c.l.s4 1983009808
    %v756 = vunpack.c.0.s8 %v755
    %v757 = vlaneseq
    %v758 = vshrl.u32 %v757, 7
    %v759 = vsub.s32 %v756, %v758
    %v760 = vrot.slane %v752, %v759
    %v762 = vunpack.c.l.s4 1983009808
    %v763 = vunpack.c.0.s8 %v762
    %v764 = vlaneseq
    %v765 = vshrl.u32 %v764, 7
    %v766 = vsub.s32 %v763, %v765
    %v767 = vrot.slane %v753, %v766
    %v768 = vcombine.low %v760, %v767
    %v769 = vcombine.low %v249, %v250
    %v770 = vcombine.low %v251, %v252
    %v772 = vunpack.c.l.s4 1983009808
    %v773 = vunpack.c.0.s8 %v772
    %v774 = vlaneseq
    %v775 = vshrl.u32 %v774, 7
    %v776 = vsub.s32 %v773, %v775
    %v777 = vrot.slane %v769, %v776
    %v779 = vunpack.c.l.s4 1983009808
    %v780 = vunpack.c.0.s8 %v779
    %v781 = vlaneseq
    %v782 = vshrl.u32 %v781, 7
    %v783 = vsub.s32 %v780, %v782
    %v784 = vrot.slane %v770, %v783
    %v785 = vcombine.low %v777, %v784
    %v786 = vcombine.low %v253, %v254
    %v787 = vcombine.low %v255, %v256
    %v789 = vunpack.c.l.s4 1983009808
    %v790 = vunpack.c.0.s8 %v789
    %v791 = vlaneseq
    %v792 = vshrl.u32 %v791, 7
    %v793 = vsub.s32 %v790, %v792
    %v794 = vrot.slane %v786, %v793
    %v796 = vunpack.c.l.s4 1983009808
    %v797 = vunpack.c.0.s8 %v796
    %v798 = vlaneseq
    %v799 = vshrl.u32 %v798, 7
    %v800 = vsub.s32 %v797, %v799
    %v801 = vrot.slane %v787, %v800
    %v802 = vcombine.low %v794, %v801
    %v803 = vcombine.low %v257, %v258
    %v804 = vcombine.low %v259, %v260
    %v806 = vunpack.c.l.s4 1983009808
    %v807 = vunpack.c.0.s8 %v806
    %v808 = vlaneseq
    %v809 = vshrl.u32 %v808, 7
    %v810 = vsub.s32 %v807, %v809
    %v811 = vrot.slane %v803, %v810
    %v813 = vunpack.c.l.s4 1983009808
    %v814 = vunpack.c.0.s8 %v813
    %v815 = vlaneseq
    %v816 = vshrl.u32 %v815, 7
    %v817 = vsub.s32 %v814, %v816
    %v818 = vrot.slane %v804, %v817
    %v819 = vcombine.low %v811, %v818
    %v820 = vcombine.low %v261, %v262
    %v821 = vcombine.low %v263, %v264
    %v823 = vunpack.c.l.s4 1983009808
    %v824 = vunpack.c.0.s8 %v823
    %v825 = vlaneseq
    %v826 = vshrl.u32 %v825, 7
    %v827 = vsub.s32 %v824, %v826
    %v828 = vrot.slane %v820, %v827
    %v830 = vunpack.c.l.s4 1983009808
    %v831 = vunpack.c.0.s8 %v830
    %v832 = vlaneseq
    %v833 = vshrl.u32 %v832, 7
    %v834 = vsub.s32 %v831, %v833
    %v835 = vrot.slane %v821, %v834
    %v836 = vcombine.low %v828, %v835
    %v837 = vcombine.low %v265, %v266
    %v838 = vcombine.low %v267, %v268
    %v840 = vunpack.c.l.s4 1983009808
    %v841 = vunpack.c.0.s8 %v840
    %v842 = vlaneseq
    %v843 = vshrl.u32 %v842, 7
    %v844 = vsub.s32 %v841, %v843
    %v845 = vrot.slane %v837, %v844
    %v847 = vunpack.c.l.s4 1983009808
    %v848 = vunpack.c.0.s8 %v847
    %v849 = vlaneseq
    %v850 = vshrl.u32 %v849, 7
    %v851 = vsub.s32 %v848, %v850
    %v852 = vrot.slane %v838, %v851
    %v853 = vcombine.low %v845, %v852
    %v854 = vcombine.low %v269, %v270
    %v855 = vcombine.low %v271, %v272
    %v857 = vunpack.c.l.s4 1983009808
    %v858 = vunpack.c.0.s8 %v857
    %v859 = vlaneseq
    %v860 = vshrl.u32 %v859, 7
    %v861 = vsub.s32 %v858, %v860
    %v862 = vrot.slane %v854, %v861
    %v864 = vunpack.c.l.s4 1983009808
    %v865 = vunpack.c.0.s8 %v864
    %v866 = vlaneseq
    %v867 = vshrl.u32 %v866, 7
    %v868 = vsub.s32 %v865, %v867
    %v869 = vrot.slane %v855, %v868
    %v870 = vcombine.low %v862, %v869
    %v871 = vcombine.low %v273, %v274
    %v872 = vcombine.low %v275, %v276
    %v874 = vunpack.c.l.s4 1983009808
    %v875 = vunpack.c.0.s8 %v874
    %v876 = vlaneseq
    %v877 = vshrl.u32 %v876, 7
    %v878 = vsub.s32 %v875, %v877
    %v879 = vrot.slane %v871, %v878
    %v881 = vunpack.c.l.s4 1983009808
    %v882 = vunpack.c.0.s8 %v881
    %v883 = vlaneseq
    %v884 = vshrl.u32 %v883, 7
    %v885 = vsub.s32 %v882, %v884
    %v886 = vrot.slane %v872, %v885
    %v887 = vcombine.low %v879, %v886
    %v888 = vcombine.low %v277, %v278
    %v889 = vcombine.low %v279, %v280
    %v891 = vunpack.c.l.s4 1983009808
    %v892 = vunpack.c.0.s8 %v891
    %v893 = vlaneseq
    %v894 = vshrl.u32 %v893, 7
    %v895 = vsub.s32 %v892, %v894
    %v896 = vrot.slane %v888, %v895
    %v898 = vunpack.c.l.s4 1983009808
    %v899 = vunpack.c.0.s8 %v898
    %v900 = vlaneseq
    %v901 = vshrl.u32 %v900, 7
    %v902 = vsub.s32 %v899, %v901
    %v903 = vrot.slane %v889, %v902
    %v904 = vcombine.low %v896, %v903
    %v905 = vcombine.low %v281, %v282
    %v906 = vcombine.low %v283, %v284
    %v908 = vunpack.c.l.s4 1983009808
    %v909 = vunpack.c.0.s8 %v908
    %v910 = vlaneseq
    %v911 = vshrl.u32 %v910, 7
    %v912 = vsub.s32 %v909, %v911
    %v913 = vrot.slane %v905, %v912
    %v915 = vunpack.c.l.s4 1983009808
    %v916 = vunpack.c.0.s8 %v915
    %v917 = vlaneseq
    %v918 = vshrl.u32 %v917, 7
    %v919 = vsub.s32 %v916, %v918
    %v920 = vrot.slane %v906, %v919
    %v921 = vcombine.low %v913, %v920
    %v922 = vcombine.low %v285, %v286
    %v923 = vcombine.low %v287, %v288
    %v925 = vunpack.c.l.s4 1983009808
    %v926 = vunpack.c.0.s8 %v925
    %v927 = vlaneseq
    %v928 = vshrl.u32 %v927, 7
    %v929 = vsub.s32 %v926, %v928
    %v930 = vrot.slane %v922, %v929
    %v932 = vunpack.c.l.s4 1983009808
    %v933 = vunpack.c.0.s8 %v932
    %v934 = vlaneseq
    %v935 = vshrl.u32 %v934, 7
    %v936 = vsub.s32 %v933, %v935
    %v937 = vrot.slane %v923, %v936
    %v938 = vcombine.low %v930, %v937
    %v939 = vcombine.low %v289, %v290
    %v940 = vcombine.low %v291, %v292
    %v942 = vunpack.c.l.s4 1983009808
    %v943 = vunpack.c.0.s8 %v942
    %v944 = vlaneseq
    %v945 = vshrl.u32 %v944, 7
    %v946 = vsub.s32 %v943, %v945
    %v947 = vrot.slane %v939, %v946
    %v949 = vunpack.c.l.s4 1983009808
    %v950 = vunpack.c.0.s8 %v949
    %v951 = vlaneseq
    %v952 = vshrl.u32 %v951, 7
    %v953 = vsub.s32 %v950, %v952
    %v954 = vrot.slane %v940, %v953
    %v955 = vcombine.low %v947, %v954
    %v956 = vcombine.low %v293, %v294
    %v957 = vcombine.low %v295, %v296
    %v959 = vunpack.c.l.s4 1983009808
    %v960 = vunpack.c.0.s8 %v959
    %v961 = vlaneseq
    %v962 = vshrl.u32 %v961, 7
    %v963 = vsub.s32 %v960, %v962
    %v964 = vrot.slane %v956, %v963
    %v966 = vunpack.c.l.s4 1983009808
    %v967 = vunpack.c.0.s8 %v966
    %v968 = vlaneseq
    %v969 = vshrl.u32 %v968, 7
    %v970 = vsub.s32 %v967, %v969
    %v971 = vrot.slane %v957, %v970
    %v972 = vcombine.low %v964, %v971
    %vm973 = vcmask 261120
    %v974 = vsel %vm973, %v445, 0
    %v976 = vsel %vm973, %v462, 0
    %v978 = vsel %vm973, %v479, 0
    %v980 = vsel %vm973, %v496, 0
    %v982 = vsel %vm973, %v513, 0
    %v984 = vsel %vm973, %v530, 0
    %v986 = vsel %vm973, %v547, 0
    %v988 = vsel %vm973, %v564, 0
    %v990 = vsel %vm973, %v581, 0
    %v992 = vsel %vm973, %v598, 0
    %v994 = vsel %vm973, %v615, 0
    %v996 = vsel %vm973, %v632, 0
    %v998 = vsel %vm973, %v649, 0
    %v1000 = vsel %vm973, %v666, 0
    %v1002 = vsel %vm973, %v683, 0
    %v1004 = vsel %vm973, %v700, 0
    %v1006 = vsel %vm973, %v717, 0
    %v1008 = vsel %vm973, %v734, 0
    %v1010 = vsel %vm973, %v751, 0
    %v1012 = vsel %vm973, %v768, 0
    %v1014 = vsel %vm973, %v785, 0
    %v1016 = vsel %vm973, %v802, 0
    %v1018 = vsel %vm973, %v819, 0
    %v1020 = vsel %vm973, %v836, 0
    %v1022 = vsel %vm973, %v853, 0
    %v1024 = vsel %vm973, %v870, 0
    %v1026 = vsel %vm973, %v887, 0
    %v1028 = vsel %vm973, %v904, 0
    %v1030 = vsel %vm973, %v921, 0
    %v1032 = vsel %vm973, %v938, 0
    %v1034 = vsel %vm973, %v955, 0
    %v1036 = vsel %vm973, %v972, 0
    %1038 = vmatprep.subr.mxu0 0.0
    %1039 = vmatpush1.msra.mxu0 0.0
    %1040 = vmatprep.subr.mxu0 0.0
    %1041 = vmatpush1.msra.mxu0 0.0
    %1042 = vmatprep.subr.mxu0 0.0
    %1043 = vmatpush1.msra.mxu0 0.0
    %1044 = vmatprep.subr.mxu0 0.0
    %1045 = vmatpush1.msra.mxu0 0.0
    %1046 = vmatprep.subr.mxu0 0.0
    %1047 = vmatpush1.msra.mxu0 0.0
    %1048 = vmatprep.subr.mxu0 0.0
    %1049 = vmatpush1.msra.mxu0 0.0
    %1050 = vmatprep.subr.mxu0 0.0
    %1051 = vmatpush1.msra.mxu0 0.0
    %1052 = vmatprep.subr.mxu0 0.0
    %1053 = vmatpush1.msra.mxu0 0.0
    %1054 = vmatprep.subr.mxu0 0.0
    %1055 = vmatpush1.msra.mxu0 0.0
    %1056 = vmatprep.subr.mxu0 0.0
    %1057 = vmatpush1.msra.mxu0 0.0
    %1058 = vmatprep.subr.mxu0 0.0
    %1059 = vmatpush1.msra.mxu0 0.0
    %1060 = vmatprep.subr.mxu0 0.0
    %1061 = vmatpush1.msra.mxu0 0.0
    %1062 = vmatprep.subr.mxu0 0.0
    %1063 = vmatpush1.msra.mxu0 %v300
    %1064 = vmatprep.subr.mxu0 0.0
    %1065 = vmatpush1.msra.mxu0 %v299
    %1066 = vmatprep.subr.mxu0 0.0
    %1067 = vmatpush1.msra.mxu0 %v298
    %1068 = vmatprep.subr.mxu0 0.0
    %1069 = vmatpush1.msra.mxu0 %v297
    %1070 = vmatprep.subr.mxu0 0.0
    %1071 = vmatpush2.msra.mxu0 0.0
    %1072 = vmatprep.subr.mxu0 0.0
    %1073 = vmatpush2.msra.mxu0 0.0
    %1074 = vmatprep.subr.mxu0 0.0
    %1075 = vmatpush2.msra.mxu0 0.0
    %1076 = vmatprep.subr.mxu0 0.0
    %1077 = vmatpush2.msra.mxu0 0.0
    %1078 = vmatprep.subr.mxu0 0.0
    %1079 = vmatpush2.msra.mxu0 0.0
    %1080 = vmatprep.subr.mxu0 0.0
    %1081 = vmatpush2.msra.mxu0 0.0
    %1082 = vmatprep.subr.mxu0 0.0
    %1083 = vmatpush2.msra.mxu0 0.0
    %1084 = vmatprep.subr.mxu0 0.0
    %1085 = vmatpush2.msra.mxu0 0.0
    %1086 = vmatprep.subr.mxu0 0.0
    %1087 = vmatpush2.msra.mxu0 0.0
    %1088 = vmatprep.subr.mxu0 0.0
    %1089 = vmatpush2.msra.mxu0 0.0
    %1090 = vmatprep.subr.mxu0 0.0
    %1091 = vmatpush2.msra.mxu0 0.0
    %1092 = vmatprep.subr.mxu0 0.0
    %1093 = vmatpush2.msra.mxu0 0.0
    %1094 = vmatprep.subr.mxu0 0.0
    %1095 = vmatpush2.msra.mxu0 0.0
    %1096 = vmatprep.subr.mxu0 0.0
    %1097 = vmatpush2.msra.mxu0 0.0
    %1098 = vmatprep.subr.mxu0 0.0
    %1099 = vmatpush2.msra.mxu0 0.0
    %1100 = vmatprep.subr.mxu0 0.0
    %1101 = vmatpush2.msra.mxu0 0.0
    %1102 = vmatprep.mubr.f32.mxu0 0.0
    %1103 = vmatmul.mubr.f32.gmra.mxu0 %v974
    %v1104 = vpop.f32.mrf.mxu0
    %v1105 = vadd.f32 0.0, %v1104
    %v1106 = vpop.f32.mrf.mxu0
    %1107 = vmatprep.mubr.f32.mxu0 0.0
    %1108 = vmatmul.mubr.f32.gmra.mxu0 %v976
    %v1109 = vpop.f32.mrf.mxu0
    %v1110 = vadd.f32 0.0, %v1109
    %v1111 = vpop.f32.mrf.mxu0
    %1112 = vmatprep.mubr.f32.mxu0 0.0
    %1113 = vmatmul.mubr.f32.gmra.mxu0 %v978
    %v1114 = vpop.f32.mrf.mxu0
    %v1115 = vadd.f32 0.0, %v1114
    %v1116 = vpop.f32.mrf.mxu0
    %1117 = vmatprep.mubr.f32.mxu0 0.0
    %1118 = vmatmul.mubr.f32.gmra.mxu0 %v980
    %v1119 = vpop.f32.mrf.mxu0
    %v1120 = vadd.f32 0.0, %v1119
    %v1121 = vpop.f32.mrf.mxu0
    %1122 = vmatprep.mubr.f32.mxu0 0.0
    %1123 = vmatmul.mubr.f32.gmra.mxu0 %v982
    %v1124 = vpop.f32.mrf.mxu0
    %v1125 = vadd.f32 0.0, %v1124
    %v1126 = vpop.f32.mrf.mxu0
    %1127 = vmatprep.mubr.f32.mxu0 0.0
    %1128 = vmatmul.mubr.f32.gmra.mxu0 %v984
    %v1129 = vpop.f32.mrf.mxu0
    %v1130 = vadd.f32 0.0, %v1129
    %v1131 = vpop.f32.mrf.mxu0
    %1132 = vmatprep.mubr.f32.mxu0 0.0
    %1133 = vmatmul.mubr.f32.gmra.mxu0 %v986
    %v1134 = vpop.f32.mrf.mxu0
    %v1135 = vadd.f32 0.0, %v1134
    %v1136 = vpop.f32.mrf.mxu0
    %1137 = vmatprep.mubr.f32.mxu0 0.0
    %1138 = vmatmul.mubr.f32.gmra.mxu0 %v988
    %v1139 = vpop.f32.mrf.mxu0
    %v1140 = vadd.f32 0.0, %v1139
    %v1141 = vpop.f32.mrf.mxu0
    %1142 = vmatprep.mubr.f32.mxu0 0.0
    %1143 = vmatmul.mubr.f32.gmra.mxu0 %v990
    %v1144 = vpop.f32.mrf.mxu0
    %v1145 = vadd.f32 0.0, %v1144
    %v1146 = vpop.f32.mrf.mxu0
    %1147 = vmatprep.mubr.f32.mxu0 0.0
    %1148 = vmatmul.mubr.f32.gmra.mxu0 %v992
    %v1149 = vpop.f32.mrf.mxu0
    %v1150 = vadd.f32 0.0, %v1149
    %v1151 = vpop.f32.mrf.mxu0
    %1152 = vmatprep.mubr.f32.mxu0 0.0
    %1153 = vmatmul.mubr.f32.gmra.mxu0 %v994
    %v1154 = vpop.f32.mrf.mxu0
    %v1155 = vadd.f32 0.0, %v1154
    %v1156 = vpop.f32.mrf.mxu0
    %1157 = vmatprep.mubr.f32.mxu0 0.0
    %1158 = vmatmul.mubr.f32.gmra.mxu0 %v996
    %v1159 = vpop.f32.mrf.mxu0
    %v1160 = vadd.f32 0.0, %v1159
    %v1161 = vpop.f32.mrf.mxu0
    %1162 = vmatprep.mubr.f32.mxu0 0.0
    %1163 = vmatmul.mubr.f32.gmra.mxu0 %v998
    %v1164 = vpop.f32.mrf.mxu0
    %v1165 = vadd.f32 0.0, %v1164
    %v1166 = vpop.f32.mrf.mxu0
    %1167 = vmatprep.mubr.f32.mxu0 0.0
    %1168 = vmatmul.mubr.f32.gmra.mxu0 %v1000
    %v1169 = vpop.f32.mrf.mxu0
    %v1170 = vadd.f32 0.0, %v1169
    %v1171 = vpop.f32.mrf.mxu0
    %1172 = vmatprep.mubr.f32.mxu0 0.0
    %1173 = vmatmul.mubr.f32.gmra.mxu0 %v1002
    %v1174 = vpop.f32.mrf.mxu0
    %v1175 = vadd.f32 0.0, %v1174
    %v1176 = vpop.f32.mrf.mxu0
    %1177 = vmatprep.mubr.f32.mxu0 0.0
    %1178 = vmatmul.mubr.f32.gmra.mxu0 %v1004
    %v1179 = vpop.f32.mrf.mxu0
    %v1180 = vadd.f32 0.0, %v1179
    %v1181 = vpop.f32.mrf.mxu0
    %1182 = vmatprep.mubr.f32.mxu0 0.0
    %1183 = vmatmul.mubr.f32.gmra.mxu0 %v1006
    %v1184 = vpop.f32.mrf.mxu0
    %v1185 = vadd.f32 0.0, %v1184
    %v1186 = vpop.f32.mrf.mxu0
    %1187 = vmatprep.mubr.f32.mxu0 0.0
    %1188 = vmatmul.mubr.f32.gmra.mxu0 %v1008
    %v1189 = vpop.f32.mrf.mxu0
    %v1190 = vadd.f32 0.0, %v1189
    %v1191 = vpop.f32.mrf.mxu0
    %1192 = vmatprep.mubr.f32.mxu0 0.0
    %1193 = vmatmul.mubr.f32.gmra.mxu0 %v1010
    %v1194 = vpop.f32.mrf.mxu0
    %v1195 = vadd.f32 0.0, %v1194
    %v1196 = vpop.f32.mrf.mxu0
    %1197 = vmatprep.mubr.f32.mxu0 0.0
    %1198 = vmatmul.mubr.f32.gmra.mxu0 %v1012
    %v1199 = vpop.f32.mrf.mxu0
    %v1200 = vadd.f32 0.0, %v1199
    %v1201 = vpop.f32.mrf.mxu0
    %1202 = vmatprep.mubr.f32.mxu0 0.0
    %1203 = vmatmul.mubr.f32.gmra.mxu0 %v1014
    %v1204 = vpop.f32.mrf.mxu0
    %v1205 = vadd.f32 0.0, %v1204
    %v1206 = vpop.f32.mrf.mxu0
    %1207 = vmatprep.mubr.f32.mxu0 0.0
    %1208 = vmatmul.mubr.f32.gmra.mxu0 %v1016
    %v1209 = vpop.f32.mrf.mxu0
    %v1210 = vadd.f32 0.0, %v1209
    %v1211 = vpop.f32.mrf.mxu0
    %1212 = vmatprep.mubr.f32.mxu0 0.0
    %1213 = vmatmul.mubr.f32.gmra.mxu0 %v1018
    %v1214 = vpop.f32.mrf.mxu0
    %v1215 = vadd.f32 0.0, %v1214
    %v1216 = vpop.f32.mrf.mxu0
    %1217 = vmatprep.mubr.f32.mxu0 0.0
    %1218 = vmatmul.mubr.f32.gmra.mxu0 %v1020
    %v1219 = vpop.f32.mrf.mxu0
    %v1220 = vadd.f32 0.0, %v1219
    %v1221 = vpop.f32.mrf.mxu0
    %1222 = vmatprep.mubr.f32.mxu0 0.0
    %1223 = vmatmul.mubr.f32.gmra.mxu0 %v1022
    %v1224 = vpop.f32.mrf.mxu0
    %v1225 = vadd.f32 0.0, %v1224
    %v1226 = vpop.f32.mrf.mxu0
    %1227 = vmatprep.mubr.f32.mxu0 0.0
    %1228 = vmatmul.mubr.f32.gmra.mxu0 %v1024
    %v1229 = vpop.f32.mrf.mxu0
    %v1230 = vadd.f32 0.0, %v1229
    %v1231 = vpop.f32.mrf.mxu0
    %1232 = vmatprep.mubr.f32.mxu0 0.0
    %1233 = vmatmul.mubr.f32.gmra.mxu0 %v1026
    %v1234 = vpop.f32.mrf.mxu0
    %v1235 = vadd.f32 0.0, %v1234
    %v1236 = vpop.f32.mrf.mxu0
    %1237 = vmatprep.mubr.f32.mxu0 0.0
    %1238 = vmatmul.mubr.f32.gmra.mxu0 %v1028
    %v1239 = vpop.f32.mrf.mxu0
    %v1240 = vadd.f32 0.0, %v1239
    %v1241 = vpop.f32.mrf.mxu0
    %1242 = vmatprep.mubr.f32.mxu0 0.0
    %1243 = vmatmul.mubr.f32.gmra.mxu0 %v1030
    %v1244 = vpop.f32.mrf.mxu0
    %v1245 = vadd.f32 0.0, %v1244
    %v1246 = vpop.f32.mrf.mxu0
    %1247 = vmatprep.mubr.f32.mxu0 0.0
    %1248 = vmatmul.mubr.f32.gmra.mxu0 %v1032
    %v1249 = vpop.f32.mrf.mxu0
    %v1250 = vadd.f32 0.0, %v1249
    %v1251 = vpop.f32.mrf.mxu0
    %1252 = vmatprep.mubr.f32.mxu0 0.0
    %1253 = vmatmul.mubr.f32.gmra.mxu0 %v1034
    %v1254 = vpop.f32.mrf.mxu0
    %v1255 = vadd.f32 0.0, %v1254
    %v1256 = vpop.f32.mrf.mxu0
    %1257 = vmatprep.mubr.f32.mxu0 0.0
    %1258 = vmatmul.mubr.f32.gmra.mxu0 %v1036
    %v1259 = vpop.f32.mrf.mxu0
    %v1260 = vadd.f32 0.0, %v1259
    %v1261 = vpop.f32.mrf.mxu0
    %1262 = vdwg.mxu0
    %v1295 = vcombine.high %v1105, %v1105
    %v1297 = vunpack.c.l.s4 1983009808
    %v1298 = vunpack.c.0.s8 %v1297
    %v1299 = vlaneseq
    %v1300 = vshrl.u32 %v1299, 7
    %v1301 = vsub.s32 %v1298, %v1300
    %v1302 = vrot.slane %v1105, %v1301
    %v1304 = vunpack.c.l.s4 1983009808
    %v1305 = vunpack.c.0.s8 %v1304
    %v1306 = vlaneseq
    %v1307 = vshrl.u32 %v1306, 7
    %v1308 = vsub.s32 %v1305, %v1307
    %v1309 = vrot.slane %v1295, %v1308
    %v1310 = vcombine.high %v1302, %v1302
    %v1311 = vcombine.high %v1309, %v1309
    %v1312 = vcombine.high %v1110, %v1110
    %v1314 = vunpack.c.l.s4 1983009808
    %v1315 = vunpack.c.0.s8 %v1314
    %v1316 = vlaneseq
    %v1317 = vshrl.u32 %v1316, 7
    %v1318 = vsub.s32 %v1315, %v1317
    %v1319 = vrot.slane %v1110, %v1318
    %v1321 = vunpack.c.l.s4 1983009808
    %v1322 = vunpack.c.0.s8 %v1321
    %v1323 = vlaneseq
    %v1324 = vshrl.u32 %v1323, 7
    %v1325 = vsub.s32 %v1322, %v1324
    %v1326 = vrot.slane %v1312, %v1325
    %v1327 = vcombine.high %v1319, %v1319
    %v1328 = vcombine.high %v1326, %v1326
    %v1329 = vcombine.high %v1115, %v1115
    %v1331 = vunpack.c.l.s4 1983009808
    %v1332 = vunpack.c.0.s8 %v1331
    %v1333 = vlaneseq
    %v1334 = vshrl.u32 %v1333, 7
    %v1335 = vsub.s32 %v1332, %v1334
    %v1336 = vrot.slane %v1115, %v1335
    %v1338 = vunpack.c.l.s4 1983009808
    %v1339 = vunpack.c.0.s8 %v1338
    %v1340 = vlaneseq
    %v1341 = vshrl.u32 %v1340, 7
    %v1342 = vsub.s32 %v1339, %v1341
    %v1343 = vrot.slane %v1329, %v1342
    %v1344 = vcombine.high %v1336, %v1336
    %v1345 = vcombine.high %v1343, %v1343
    %v1346 = vcombine.high %v1120, %v1120
    %v1348 = vunpack.c.l.s4 1983009808
    %v1349 = vunpack.c.0.s8 %v1348
    %v1350 = vlaneseq
    %v1351 = vshrl.u32 %v1350, 7
    %v1352 = vsub.s32 %v1349, %v1351
    %v1353 = vrot.slane %v1120, %v1352
    %v1355 = vunpack.c.l.s4 1983009808
    %v1356 = vunpack.c.0.s8 %v1355
    %v1357 = vlaneseq
    %v1358 = vshrl.u32 %v1357, 7
    %v1359 = vsub.s32 %v1356, %v1358
    %v1360 = vrot.slane %v1346, %v1359
    %v1361 = vcombine.high %v1353, %v1353
    %v1362 = vcombine.high %v1360, %v1360
    %v1363 = vcombine.high %v1125, %v1125
    %v1365 = vunpack.c.l.s4 1983009808
    %v1366 = vunpack.c.0.s8 %v1365
    %v1367 = vlaneseq
    %v1368 = vshrl.u32 %v1367, 7
    %v1369 = vsub.s32 %v1366, %v1368
    %v1370 = vrot.slane %v1125, %v1369
    %v1372 = vunpack.c.l.s4 1983009808
    %v1373 = vunpack.c.0.s8 %v1372
    %v1374 = vlaneseq
    %v1375 = vshrl.u32 %v1374, 7
    %v1376 = vsub.s32 %v1373, %v1375
    %v1377 = vrot.slane %v1363, %v1376
    %v1378 = vcombine.high %v1370, %v1370
    %v1379 = vcombine.high %v1377, %v1377
    %v1380 = vcombine.high %v1130, %v1130
    %v1382 = vunpack.c.l.s4 1983009808
    %v1383 = vunpack.c.0.s8 %v1382
    %v1384 = vlaneseq
    %v1385 = vshrl.u32 %v1384, 7
    %v1386 = vsub.s32 %v1383, %v1385
    %v1387 = vrot.slane %v1130, %v1386
    %v1389 = vunpack.c.l.s4 1983009808
    %v1390 = vunpack.c.0.s8 %v1389
    %v1391 = vlaneseq
    %v1392 = vshrl.u32 %v1391, 7
    %v1393 = vsub.s32 %v1390, %v1392
    %v1394 = vrot.slane %v1380, %v1393
    %v1395 = vcombine.high %v1387, %v1387
    %v1396 = vcombine.high %v1394, %v1394
    %v1397 = vcombine.high %v1135, %v1135
    %v1399 = vunpack.c.l.s4 1983009808
    %v1400 = vunpack.c.0.s8 %v1399
    %v1401 = vlaneseq
    %v1402 = vshrl.u32 %v1401, 7
    %v1403 = vsub.s32 %v1400, %v1402
    %v1404 = vrot.slane %v1135, %v1403
    %v1406 = vunpack.c.l.s4 1983009808
    %v1407 = vunpack.c.0.s8 %v1406
    %v1408 = vlaneseq
    %v1409 = vshrl.u32 %v1408, 7
    %v1410 = vsub.s32 %v1407, %v1409
    %v1411 = vrot.slane %v1397, %v1410
    %v1412 = vcombine.high %v1404, %v1404
    %v1413 = vcombine.high %v1411, %v1411
    %v1414 = vcombine.high %v1140, %v1140
    %v1416 = vunpack.c.l.s4 1983009808
    %v1417 = vunpack.c.0.s8 %v1416
    %v1418 = vlaneseq
    %v1419 = vshrl.u32 %v1418, 7
    %v1420 = vsub.s32 %v1417, %v1419
    %v1421 = vrot.slane %v1140, %v1420
    %v1423 = vunpack.c.l.s4 1983009808
    %v1424 = vunpack.c.0.s8 %v1423
    %v1425 = vlaneseq
    %v1426 = vshrl.u32 %v1425, 7
    %v1427 = vsub.s32 %v1424, %v1426
    %v1428 = vrot.slane %v1414, %v1427
    %v1429 = vcombine.high %v1421, %v1421
    %v1430 = vcombine.high %v1428, %v1428
    %v1431 = vcombine.high %v1145, %v1145
    %v1433 = vunpack.c.l.s4 1983009808
    %v1434 = vunpack.c.0.s8 %v1433
    %v1435 = vlaneseq
    %v1436 = vshrl.u32 %v1435, 7
    %v1437 = vsub.s32 %v1434, %v1436
    %v1438 = vrot.slane %v1145, %v1437
    %v1440 = vunpack.c.l.s4 1983009808
    %v1441 = vunpack.c.0.s8 %v1440
    %v1442 = vlaneseq
    %v1443 = vshrl.u32 %v1442, 7
    %v1444 = vsub.s32 %v1441, %v1443
    %v1445 = vrot.slane %v1431, %v1444
    %v1446 = vcombine.high %v1438, %v1438
    %v1447 = vcombine.high %v1445, %v1445
    %v1448 = vcombine.high %v1150, %v1150
    %v1450 = vunpack.c.l.s4 1983009808
    %v1451 = vunpack.c.0.s8 %v1450
    %v1452 = vlaneseq
    %v1453 = vshrl.u32 %v1452, 7
    %v1454 = vsub.s32 %v1451, %v1453
    %v1455 = vrot.slane %v1150, %v1454
    %v1457 = vunpack.c.l.s4 1983009808
    %v1458 = vunpack.c.0.s8 %v1457
    %v1459 = vlaneseq
    %v1460 = vshrl.u32 %v1459, 7
    %v1461 = vsub.s32 %v1458, %v1460
    %v1462 = vrot.slane %v1448, %v1461
    %v1463 = vcombine.high %v1455, %v1455
    %v1464 = vcombine.high %v1462, %v1462
    %v1465 = vcombine.high %v1155, %v1155
    %v1467 = vunpack.c.l.s4 1983009808
    %v1468 = vunpack.c.0.s8 %v1467
    %v1469 = vlaneseq
    %v1470 = vshrl.u32 %v1469, 7
    %v1471 = vsub.s32 %v1468, %v1470
    %v1472 = vrot.slane %v1155, %v1471
    %v1474 = vunpack.c.l.s4 1983009808
    %v1475 = vunpack.c.0.s8 %v1474
    %v1476 = vlaneseq
    %v1477 = vshrl.u32 %v1476, 7
    %v1478 = vsub.s32 %v1475, %v1477
    %v1479 = vrot.slane %v1465, %v1478
    %v1480 = vcombine.high %v1472, %v1472
    %v1481 = vcombine.high %v1479, %v1479
    %v1482 = vcombine.high %v1160, %v1160
    %v1484 = vunpack.c.l.s4 1983009808
    %v1485 = vunpack.c.0.s8 %v1484
    %v1486 = vlaneseq
    %v1487 = vshrl.u32 %v1486, 7
    %v1488 = vsub.s32 %v1485, %v1487
    %v1489 = vrot.slane %v1160, %v1488
    %v1491 = vunpack.c.l.s4 1983009808
    %v1492 = vunpack.c.0.s8 %v1491
    %v1493 = vlaneseq
    %v1494 = vshrl.u32 %v1493, 7
    %v1495 = vsub.s32 %v1492, %v1494
    %v1496 = vrot.slane %v1482, %v1495
    %v1497 = vcombine.high %v1489, %v1489
    %v1498 = vcombine.high %v1496, %v1496
    %v1499 = vcombine.high %v1165, %v1165
    %v1501 = vunpack.c.l.s4 1983009808
    %v1502 = vunpack.c.0.s8 %v1501
    %v1503 = vlaneseq
    %v1504 = vshrl.u32 %v1503, 7
    %v1505 = vsub.s32 %v1502, %v1504
    %v1506 = vrot.slane %v1165, %v1505
    %v1508 = vunpack.c.l.s4 1983009808
    %v1509 = vunpack.c.0.s8 %v1508
    %v1510 = vlaneseq
    %v1511 = vshrl.u32 %v1510, 7
    %v1512 = vsub.s32 %v1509, %v1511
    %v1513 = vrot.slane %v1499, %v1512
    %v1514 = vcombine.high %v1506, %v1506
    %v1515 = vcombine.high %v1513, %v1513
    %v1516 = vcombine.high %v1170, %v1170
    %v1518 = vunpack.c.l.s4 1983009808
    %v1519 = vunpack.c.0.s8 %v1518
    %v1520 = vlaneseq
    %v1521 = vshrl.u32 %v1520, 7
    %v1522 = vsub.s32 %v1519, %v1521
    %v1523 = vrot.slane %v1170, %v1522
    %v1525 = vunpack.c.l.s4 1983009808
    %v1526 = vunpack.c.0.s8 %v1525
    %v1527 = vlaneseq
    %v1528 = vshrl.u32 %v1527, 7
    %v1529 = vsub.s32 %v1526, %v1528
    %v1530 = vrot.slane %v1516, %v1529
    %v1531 = vcombine.high %v1523, %v1523
    %v1532 = vcombine.high %v1530, %v1530
    %v1533 = vcombine.high %v1175, %v1175
    %v1535 = vunpack.c.l.s4 1983009808
    %v1536 = vunpack.c.0.s8 %v1535
    %v1537 = vlaneseq
    %v1538 = vshrl.u32 %v1537, 7
    %v1539 = vsub.s32 %v1536, %v1538
    %v1540 = vrot.slane %v1175, %v1539
    %v1542 = vunpack.c.l.s4 1983009808
    %v1543 = vunpack.c.0.s8 %v1542
    %v1544 = vlaneseq
    %v1545 = vshrl.u32 %v1544, 7
    %v1546 = vsub.s32 %v1543, %v1545
    %v1547 = vrot.slane %v1533, %v1546
    %v1548 = vcombine.high %v1540, %v1540
    %v1549 = vcombine.high %v1547, %v1547
    %v1550 = vcombine.high %v1180, %v1180
    %v1552 = vunpack.c.l.s4 1983009808
    %v1553 = vunpack.c.0.s8 %v1552
    %v1554 = vlaneseq
    %v1555 = vshrl.u32 %v1554, 7
    %v1556 = vsub.s32 %v1553, %v1555
    %v1557 = vrot.slane %v1180, %v1556
    %v1559 = vunpack.c.l.s4 1983009808
    %v1560 = vunpack.c.0.s8 %v1559
    %v1561 = vlaneseq
    %v1562 = vshrl.u32 %v1561, 7
    %v1563 = vsub.s32 %v1560, %v1562
    %v1564 = vrot.slane %v1550, %v1563
    %v1565 = vcombine.high %v1557, %v1557
    %v1566 = vcombine.high %v1564, %v1564
    %v1567 = vcombine.high %v1185, %v1185
    %v1569 = vunpack.c.l.s4 1983009808
    %v1570 = vunpack.c.0.s8 %v1569
    %v1571 = vlaneseq
    %v1572 = vshrl.u32 %v1571, 7
    %v1573 = vsub.s32 %v1570, %v1572
    %v1574 = vrot.slane %v1185, %v1573
    %v1576 = vunpack.c.l.s4 1983009808
    %v1577 = vunpack.c.0.s8 %v1576
    %v1578 = vlaneseq
    %v1579 = vshrl.u32 %v1578, 7
    %v1580 = vsub.s32 %v1577, %v1579
    %v1581 = vrot.slane %v1567, %v1580
    %v1582 = vcombine.high %v1574, %v1574
    %v1583 = vcombine.high %v1581, %v1581
    %v1584 = vcombine.high %v1190, %v1190
    %v1586 = vunpack.c.l.s4 1983009808
    %v1587 = vunpack.c.0.s8 %v1586
    %v1588 = vlaneseq
    %v1589 = vshrl.u32 %v1588, 7
    %v1590 = vsub.s32 %v1587, %v1589
    %v1591 = vrot.slane %v1190, %v1590
    %v1593 = vunpack.c.l.s4 1983009808
    %v1594 = vunpack.c.0.s8 %v1593
    %v1595 = vlaneseq
    %v1596 = vshrl.u32 %v1595, 7
    %v1597 = vsub.s32 %v1594, %v1596
    %v1598 = vrot.slane %v1584, %v1597
    %v1599 = vcombine.high %v1591, %v1591
    %v1600 = vcombine.high %v1598, %v1598
    %v1601 = vcombine.high %v1195, %v1195
    %v1603 = vunpack.c.l.s4 1983009808
    %v1604 = vunpack.c.0.s8 %v1603
    %v1605 = vlaneseq
    %v1606 = vshrl.u32 %v1605, 7
    %v1607 = vsub.s32 %v1604, %v1606
    %v1608 = vrot.slane %v1195, %v1607
    %v1610 = vunpack.c.l.s4 1983009808
    %v1611 = vunpack.c.0.s8 %v1610
    %v1612 = vlaneseq
    %v1613 = vshrl.u32 %v1612, 7
    %v1614 = vsub.s32 %v1611, %v1613
    %v1615 = vrot.slane %v1601, %v1614
    %v1616 = vcombine.high %v1608, %v1608
    %v1617 = vcombine.high %v1615, %v1615
    %v1618 = vcombine.high %v1200, %v1200
    %v1620 = vunpack.c.l.s4 1983009808
    %v1621 = vunpack.c.0.s8 %v1620
    %v1622 = vlaneseq
    %v1623 = vshrl.u32 %v1622, 7
    %v1624 = vsub.s32 %v1621, %v1623
    %v1625 = vrot.slane %v1200, %v1624
    %v1627 = vunpack.c.l.s4 1983009808
    %v1628 = vunpack.c.0.s8 %v1627
    %v1629 = vlaneseq
    %v1630 = vshrl.u32 %v1629, 7
    %v1631 = vsub.s32 %v1628, %v1630
    %v1632 = vrot.slane %v1618, %v1631
    %v1633 = vcombine.high %v1625, %v1625
    %v1634 = vcombine.high %v1632, %v1632
    %v1635 = vcombine.high %v1205, %v1205
    %v1637 = vunpack.c.l.s4 1983009808
    %v1638 = vunpack.c.0.s8 %v1637
    %v1639 = vlaneseq
    %v1640 = vshrl.u32 %v1639, 7
    %v1641 = vsub.s32 %v1638, %v1640
    %v1642 = vrot.slane %v1205, %v1641
    %v1644 = vunpack.c.l.s4 1983009808
    %v1645 = vunpack.c.0.s8 %v1644
    %v1646 = vlaneseq
    %v1647 = vshrl.u32 %v1646, 7
    %v1648 = vsub.s32 %v1645, %v1647
    %v1649 = vrot.slane %v1635, %v1648
    %v1650 = vcombine.high %v1642, %v1642
    %v1651 = vcombine.high %v1649, %v1649
    %v1652 = vcombine.high %v1210, %v1210
    %v1654 = vunpack.c.l.s4 1983009808
    %v1655 = vunpack.c.0.s8 %v1654
    %v1656 = vlaneseq
    %v1657 = vshrl.u32 %v1656, 7
    %v1658 = vsub.s32 %v1655, %v1657
    %v1659 = vrot.slane %v1210, %v1658
    %v1661 = vunpack.c.l.s4 1983009808
    %v1662 = vunpack.c.0.s8 %v1661
    %v1663 = vlaneseq
    %v1664 = vshrl.u32 %v1663, 7
    %v1665 = vsub.s32 %v1662, %v1664
    %v1666 = vrot.slane %v1652, %v1665
    %v1667 = vcombine.high %v1659, %v1659
    %v1668 = vcombine.high %v1666, %v1666
    %v1669 = vcombine.high %v1215, %v1215
    %v1671 = vunpack.c.l.s4 1983009808
    %v1672 = vunpack.c.0.s8 %v1671
    %v1673 = vlaneseq
    %v1674 = vshrl.u32 %v1673, 7
    %v1675 = vsub.s32 %v1672, %v1674
    %v1676 = vrot.slane %v1215, %v1675
    %v1678 = vunpack.c.l.s4 1983009808
    %v1679 = vunpack.c.0.s8 %v1678
    %v1680 = vlaneseq
    %v1681 = vshrl.u32 %v1680, 7
    %v1682 = vsub.s32 %v1679, %v1681
    %v1683 = vrot.slane %v1669, %v1682
    %v1684 = vcombine.high %v1676, %v1676
    %v1685 = vcombine.high %v1683, %v1683
    %v1686 = vcombine.high %v1220, %v1220
    %v1688 = vunpack.c.l.s4 1983009808
    %v1689 = vunpack.c.0.s8 %v1688
    %v1690 = vlaneseq
    %v1691 = vshrl.u32 %v1690, 7
    %v1692 = vsub.s32 %v1689, %v1691
    %v1693 = vrot.slane %v1220, %v1692
    %v1695 = vunpack.c.l.s4 1983009808
    %v1696 = vunpack.c.0.s8 %v1695
    %v1697 = vlaneseq
    %v1698 = vshrl.u32 %v1697, 7
    %v1699 = vsub.s32 %v1696, %v1698
    %v1700 = vrot.slane %v1686, %v1699
    %v1701 = vcombine.high %v1693, %v1693
    %v1702 = vcombine.high %v1700, %v1700
    %v1703 = vcombine.high %v1225, %v1225
    %v1705 = vunpack.c.l.s4 1983009808
    %v1706 = vunpack.c.0.s8 %v1705
    %v1707 = vlaneseq
    %v1708 = vshrl.u32 %v1707, 7
    %v1709 = vsub.s32 %v1706, %v1708
    %v1710 = vrot.slane %v1225, %v1709
    %v1712 = vunpack.c.l.s4 1983009808
    %v1713 = vunpack.c.0.s8 %v1712
    %v1714 = vlaneseq
    %v1715 = vshrl.u32 %v1714, 7
    %v1716 = vsub.s32 %v1713, %v1715
    %v1717 = vrot.slane %v1703, %v1716
    %v1718 = vcombine.high %v1710, %v1710
    %v1719 = vcombine.high %v1717, %v1717
    %v1720 = vcombine.high %v1230, %v1230
    %v1722 = vunpack.c.l.s4 1983009808
    %v1723 = vunpack.c.0.s8 %v1722
    %v1724 = vlaneseq
    %v1725 = vshrl.u32 %v1724, 7
    %v1726 = vsub.s32 %v1723, %v1725
    %v1727 = vrot.slane %v1230, %v1726
    %v1729 = vunpack.c.l.s4 1983009808
    %v1730 = vunpack.c.0.s8 %v1729
    %v1731 = vlaneseq
    %v1732 = vshrl.u32 %v1731, 7
    %v1733 = vsub.s32 %v1730, %v1732
    %v1734 = vrot.slane %v1720, %v1733
    %v1735 = vcombine.high %v1727, %v1727
    %v1736 = vcombine.high %v1734, %v1734
    %v1737 = vcombine.high %v1235, %v1235
    %v1739 = vunpack.c.l.s4 1983009808
    %v1740 = vunpack.c.0.s8 %v1739
    %v1741 = vlaneseq
    %v1742 = vshrl.u32 %v1741, 7
    %v1743 = vsub.s32 %v1740, %v1742
    %v1744 = vrot.slane %v1235, %v1743
    %v1746 = vunpack.c.l.s4 1983009808
    %v1747 = vunpack.c.0.s8 %v1746
    %v1748 = vlaneseq
    %v1749 = vshrl.u32 %v1748, 7
    %v1750 = vsub.s32 %v1747, %v1749
    %v1751 = vrot.slane %v1737, %v1750
    %v1752 = vcombine.high %v1744, %v1744
    %v1753 = vcombine.high %v1751, %v1751
    %v1754 = vcombine.high %v1240, %v1240
    %v1756 = vunpack.c.l.s4 1983009808
    %v1757 = vunpack.c.0.s8 %v1756
    %v1758 = vlaneseq
    %v1759 = vshrl.u32 %v1758, 7
    %v1760 = vsub.s32 %v1757, %v1759
    %v1761 = vrot.slane %v1240, %v1760
    %v1763 = vunpack.c.l.s4 1983009808
    %v1764 = vunpack.c.0.s8 %v1763
    %v1765 = vlaneseq
    %v1766 = vshrl.u32 %v1765, 7
    %v1767 = vsub.s32 %v1764, %v1766
    %v1768 = vrot.slane %v1754, %v1767
    %v1769 = vcombine.high %v1761, %v1761
    %v1770 = vcombine.high %v1768, %v1768
    %v1771 = vcombine.high %v1245, %v1245
    %v1773 = vunpack.c.l.s4 1983009808
    %v1774 = vunpack.c.0.s8 %v1773
    %v1775 = vlaneseq
    %v1776 = vshrl.u32 %v1775, 7
    %v1777 = vsub.s32 %v1774, %v1776
    %v1778 = vrot.slane %v1245, %v1777
    %v1780 = vunpack.c.l.s4 1983009808
    %v1781 = vunpack.c.0.s8 %v1780
    %v1782 = vlaneseq
    %v1783 = vshrl.u32 %v1782, 7
    %v1784 = vsub.s32 %v1781, %v1783
    %v1785 = vrot.slane %v1771, %v1784
    %v1786 = vcombine.high %v1778, %v1778
    %v1787 = vcombine.high %v1785, %v1785
    %v1788 = vcombine.high %v1250, %v1250
    %v1790 = vunpack.c.l.s4 1983009808
    %v1791 = vunpack.c.0.s8 %v1790
    %v1792 = vlaneseq
    %v1793 = vshrl.u32 %v1792, 7
    %v1794 = vsub.s32 %v1791, %v1793
    %v1795 = vrot.slane %v1250, %v1794
    %v1797 = vunpack.c.l.s4 1983009808
    %v1798 = vunpack.c.0.s8 %v1797
    %v1799 = vlaneseq
    %v1800 = vshrl.u32 %v1799, 7
    %v1801 = vsub.s32 %v1798, %v1800
    %v1802 = vrot.slane %v1788, %v1801
    %v1803 = vcombine.high %v1795, %v1795
    %v1804 = vcombine.high %v1802, %v1802
    %v1805 = vcombine.high %v1255, %v1255
    %v1807 = vunpack.c.l.s4 1983009808
    %v1808 = vunpack.c.0.s8 %v1807
    %v1809 = vlaneseq
    %v1810 = vshrl.u32 %v1809, 7
    %v1811 = vsub.s32 %v1808, %v1810
    %v1812 = vrot.slane %v1255, %v1811
    %v1814 = vunpack.c.l.s4 1983009808
    %v1815 = vunpack.c.0.s8 %v1814
    %v1816 = vlaneseq
    %v1817 = vshrl.u32 %v1816, 7
    %v1818 = vsub.s32 %v1815, %v1817
    %v1819 = vrot.slane %v1805, %v1818
    %v1820 = vcombine.high %v1812, %v1812
    %v1821 = vcombine.high %v1819, %v1819
    %v1822 = vcombine.high %v1260, %v1260
    %v1824 = vunpack.c.l.s4 1983009808
    %v1825 = vunpack.c.0.s8 %v1824
    %v1826 = vlaneseq
    %v1827 = vshrl.u32 %v1826, 7
    %v1828 = vsub.s32 %v1825, %v1827
    %v1829 = vrot.slane %v1260, %v1828
    %v1831 = vunpack.c.l.s4 1983009808
    %v1832 = vunpack.c.0.s8 %v1831
    %v1833 = vlaneseq
    %v1834 = vshrl.u32 %v1833, 7
    %v1835 = vsub.s32 %v1832, %v1834
    %v1836 = vrot.slane %v1822, %v1835
    %v1837 = vcombine.high %v1829, %v1829
    %v1838 = vcombine.high %v1836, %v1836
    %v1967 = vld [vmem:[#allocation2] sm:$0x3]
    %v1968 = vadd.f32 %v1302, %v1967
    %v1969 = vadd.f32 %v1310, %v1967
    %v1970 = vadd.f32 %v1309, %v1967
    %v1971 = vadd.f32 %v1311, %v1967
    %v1972 = vadd.f32 %v1319, %v1967
    %v1973 = vadd.f32 %v1327, %v1967
    %v1974 = vadd.f32 %v1326, %v1967
    %v1975 = vadd.f32 %v1328, %v1967
    %v1976 = vadd.f32 %v1336, %v1967
    %v1977 = vadd.f32 %v1344, %v1967
    %v1978 = vadd.f32 %v1343, %v1967
    %v1979 = vadd.f32 %v1345, %v1967
    %v1980 = vadd.f32 %v1353, %v1967
    %v1981 = vadd.f32 %v1361, %v1967
    %v1982 = vadd.f32 %v1360, %v1967
    %v1983 = vadd.f32 %v1362, %v1967
    %v1984 = vadd.f32 %v1370, %v1967
    %v1985 = vadd.f32 %v1378, %v1967
    %v1986 = vadd.f32 %v1377, %v1967
    %v1987 = vadd.f32 %v1379, %v1967
    %v1988 = vadd.f32 %v1387, %v1967
    %v1989 = vadd.f32 %v1395, %v1967
    %v1990 = vadd.f32 %v1394, %v1967
    %v1991 = vadd.f32 %v1396, %v1967
    %v1992 = vadd.f32 %v1404, %v1967
    %v1993 = vadd.f32 %v1412, %v1967
    %v1994 = vadd.f32 %v1411, %v1967
    %v1995 = vadd.f32 %v1413, %v1967
    %v1996 = vadd.f32 %v1421, %v1967
    %v1997 = vadd.f32 %v1429, %v1967
    %v1998 = vadd.f32 %v1428, %v1967
    %v1999 = vadd.f32 %v1430, %v1967
    %v2000 = vadd.f32 %v1438, %v1967
    %v2001 = vadd.f32 %v1446, %v1967
    %v2002 = vadd.f32 %v1445, %v1967
    %v2003 = vadd.f32 %v1447, %v1967
    %v2004 = vadd.f32 %v1455, %v1967
    %v2005 = vadd.f32 %v1463, %v1967
    %v2006 = vadd.f32 %v1462, %v1967
    %v2007 = vadd.f32 %v1464, %v1967
    %v2008 = vadd.f32 %v1472, %v1967
    %v2009 = vadd.f32 %v1480, %v1967
    %v2010 = vadd.f32 %v1479, %v1967
    %v2011 = vadd.f32 %v1481, %v1967
    %v2012 = vadd.f32 %v1489, %v1967
    %v2013 = vadd.f32 %v1497, %v1967
    %v2014 = vadd.f32 %v1496, %v1967
    %v2015 = vadd.f32 %v1498, %v1967
    %v2016 = vadd.f32 %v1506, %v1967
    %v2017 = vadd.f32 %v1514, %v1967
    %v2018 = vadd.f32 %v1513, %v1967
    %v2019 = vadd.f32 %v1515, %v1967
    %v2020 = vadd.f32 %v1523, %v1967
    %v2021 = vadd.f32 %v1531, %v1967
    %v2022 = vadd.f32 %v1530, %v1967
    %v2023 = vadd.f32 %v1532, %v1967
    %v2024 = vadd.f32 %v1540, %v1967
    %v2025 = vadd.f32 %v1548, %v1967
    %v2026 = vadd.f32 %v1547, %v1967
    %v2027 = vadd.f32 %v1549, %v1967
    %v2028 = vadd.f32 %v1557, %v1967
    %v2029 = vadd.f32 %v1565, %v1967
    %v2030 = vadd.f32 %v1564, %v1967
    %v2031 = vadd.f32 %v1566, %v1967
    %v2032 = vadd.f32 %v1574, %v1967
    %v2033 = vadd.f32 %v1582, %v1967
    %v2034 = vadd.f32 %v1581, %v1967
    %v2035 = vadd.f32 %v1583, %v1967
    %v2036 = vadd.f32 %v1591, %v1967
    %v2037 = vadd.f32 %v1599, %v1967
    %v2038 = vadd.f32 %v1598, %v1967
    %v2039 = vadd.f32 %v1600, %v1967
    %v2040 = vadd.f32 %v1608, %v1967
    %v2041 = vadd.f32 %v1616, %v1967
    %v2042 = vadd.f32 %v1615, %v1967
    %v2043 = vadd.f32 %v1617, %v1967
    %v2044 = vadd.f32 %v1625, %v1967
    %v2045 = vadd.f32 %v1633, %v1967
    %v2046 = vadd.f32 %v1632, %v1967
    %v2047 = vadd.f32 %v1634, %v1967
    %v2048 = vadd.f32 %v1642, %v1967
    %v2049 = vadd.f32 %v1650, %v1967
    %v2050 = vadd.f32 %v1649, %v1967
    %v2051 = vadd.f32 %v1651, %v1967
    %v2052 = vadd.f32 %v1659, %v1967
    %v2053 = vadd.f32 %v1667, %v1967
    %v2054 = vadd.f32 %v1666, %v1967
    %v2055 = vadd.f32 %v1668, %v1967
    %v2056 = vadd.f32 %v1676, %v1967
    %v2057 = vadd.f32 %v1684, %v1967
    %v2058 = vadd.f32 %v1683, %v1967
    %v2059 = vadd.f32 %v1685, %v1967
    %v2060 = vadd.f32 %v1693, %v1967
    %v2061 = vadd.f32 %v1701, %v1967
    %v2062 = vadd.f32 %v1700, %v1967
    %v2063 = vadd.f32 %v1702, %v1967
    %v2064 = vadd.f32 %v1710, %v1967
    %v2065 = vadd.f32 %v1718, %v1967
    %v2066 = vadd.f32 %v1717, %v1967
    %v2067 = vadd.f32 %v1719, %v1967
    %v2068 = vadd.f32 %v1727, %v1967
    %v2069 = vadd.f32 %v1735, %v1967
    %v2070 = vadd.f32 %v1734, %v1967
    %v2071 = vadd.f32 %v1736, %v1967
    %v2072 = vadd.f32 %v1744, %v1967
    %v2073 = vadd.f32 %v1752, %v1967
    %v2074 = vadd.f32 %v1751, %v1967
    %v2075 = vadd.f32 %v1753, %v1967
    %v2076 = vadd.f32 %v1761, %v1967
    %v2077 = vadd.f32 %v1769, %v1967
    %v2078 = vadd.f32 %v1768, %v1967
    %v2079 = vadd.f32 %v1770, %v1967
    %v2080 = vadd.f32 %v1778, %v1967
    %v2081 = vadd.f32 %v1786, %v1967
    %v2082 = vadd.f32 %v1785, %v1967
    %v2083 = vadd.f32 %v1787, %v1967
    %v2084 = vadd.f32 %v1795, %v1967
    %v2085 = vadd.f32 %v1803, %v1967
    %v2086 = vadd.f32 %v1802, %v1967
    %v2087 = vadd.f32 %v1804, %v1967
    %v2088 = vadd.f32 %v1812, %v1967
    %v2089 = vadd.f32 %v1820, %v1967
    %v2090 = vadd.f32 %v1819, %v1967
    %v2091 = vadd.f32 %v1821, %v1967
    %v2092 = vadd.f32 %v1829, %v1967
    %v2093 = vadd.f32 %v1837, %v1967
    %v2094 = vadd.f32 %v1836, %v1967
    %v2095 = vadd.f32 %v1838, %v1967
    %v2096 = vtanh.pop %v1968
    %v2097 = vtanh.pop %v1969
    %v2098 = vtanh.pop %v1970
    %v2099 = vtanh.pop %v1971
    %v2100 = vtanh.pop %v1972
    %v2101 = vtanh.pop %v1973
    %v2102 = vtanh.pop %v1974
    %v2103 = vtanh.pop %v1975
    %v2104 = vtanh.pop %v1976
    %v2105 = vtanh.pop %v1977
    %v2106 = vtanh.pop %v1978
    %v2107 = vtanh.pop %v1979
    %v2108 = vtanh.pop %v1980
    %v2109 = vtanh.pop %v1981
    %v2110 = vtanh.pop %v1982
    %v2111 = vtanh.pop %v1983
    %v2112 = vtanh.pop %v1984
    %v2113 = vtanh.pop %v1985
    %v2114 = vtanh.pop %v1986
    %v2115 = vtanh.pop %v1987
    %v2116 = vtanh.pop %v1988
    %v2117 = vtanh.pop %v1989
    %v2118 = vtanh.pop %v1990
    %v2119 = vtanh.pop %v1991
    %v2120 = vtanh.pop %v1992
    %v2121 = vtanh.pop %v1993
    %v2122 = vtanh.pop %v1994
    %v2123 = vtanh.pop %v1995
    %v2124 = vtanh.pop %v1996
    %v2125 = vtanh.pop %v1997
    %v2126 = vtanh.pop %v1998
    %v2127 = vtanh.pop %v1999
    %v2128 = vtanh.pop %v2000
    %v2129 = vtanh.pop %v2001
    %v2130 = vtanh.pop %v2002
    %v2131 = vtanh.pop %v2003
    %v2132 = vtanh.pop %v2004
    %v2133 = vtanh.pop %v2005
    %v2134 = vtanh.pop %v2006
    %v2135 = vtanh.pop %v2007
    %v2136 = vtanh.pop %v2008
    %v2137 = vtanh.pop %v2009
    %v2138 = vtanh.pop %v2010
    %v2139 = vtanh.pop %v2011
    %v2140 = vtanh.pop %v2012
    %v2141 = vtanh.pop %v2013
    %v2142 = vtanh.pop %v2014
    %v2143 = vtanh.pop %v2015
    %v2144 = vtanh.pop %v2016
    %v2145 = vtanh.pop %v2017
    %v2146 = vtanh.pop %v2018
    %v2147 = vtanh.pop %v2019
    %v2148 = vtanh.pop %v2020
    %v2149 = vtanh.pop %v2021
    %v2150 = vtanh.pop %v2022
    %v2151 = vtanh.pop %v2023
    %v2152 = vtanh.pop %v2024
    %v2153 = vtanh.pop %v2025
    %v2154 = vtanh.pop %v2026
    %v2155 = vtanh.pop %v2027
    %v2156 = vtanh.pop %v2028
    %v2157 = vtanh.pop %v2029
    %v2158 = vtanh.pop %v2030
    %v2159 = vtanh.pop %v2031
    %v2160 = vtanh.pop %v2032
    %v2161 = vtanh.pop %v2033
    %v2162 = vtanh.pop %v2034
    %v2163 = vtanh.pop %v2035
    %v2164 = vtanh.pop %v2036
    %v2165 = vtanh.pop %v2037
    %v2166 = vtanh.pop %v2038
    %v2167 = vtanh.pop %v2039
    %v2168 = vtanh.pop %v2040
    %v2169 = vtanh.pop %v2041
    %v2170 = vtanh.pop %v2042
    %v2171 = vtanh.pop %v2043
    %v2172 = vtanh.pop %v2044
    %v2173 = vtanh.pop %v2045
    %v2174 = vtanh.pop %v2046
    %v2175 = vtanh.pop %v2047
    %v2176 = vtanh.pop %v2048
    %v2177 = vtanh.pop %v2049
    %v2178 = vtanh.pop %v2050
    %v2179 = vtanh.pop %v2051
    %v2180 = vtanh.pop %v2052
    %v2181 = vtanh.pop %v2053
    %v2182 = vtanh.pop %v2054
    %v2183 = vtanh.pop %v2055
    %v2184 = vtanh.pop %v2056
    %v2185 = vtanh.pop %v2057
    %v2186 = vtanh.pop %v2058
    %v2187 = vtanh.pop %v2059
    %v2188 = vtanh.pop %v2060
    %v2189 = vtanh.pop %v2061
    %v2190 = vtanh.pop %v2062
    %v2191 = vtanh.pop %v2063
    %v2192 = vtanh.pop %v2064
    %v2193 = vtanh.pop %v2065
    %v2194 = vtanh.pop %v2066
    %v2195 = vtanh.pop %v2067
    %v2196 = vtanh.pop %v2068
    %v2197 = vtanh.pop %v2069
    %v2198 = vtanh.pop %v2070
    %v2199 = vtanh.pop %v2071
    %v2200 = vtanh.pop %v2072
    %v2201 = vtanh.pop %v2073
    %v2202 = vtanh.pop %v2074
    %v2203 = vtanh.pop %v2075
    %v2204 = vtanh.pop %v2076
    %v2205 = vtanh.pop %v2077
    %v2206 = vtanh.pop %v2078
    %v2207 = vtanh.pop %v2079
    %v2208 = vtanh.pop %v2080
    %v2209 = vtanh.pop %v2081
    %v2210 = vtanh.pop %v2082
    %v2211 = vtanh.pop %v2083
    %v2212 = vtanh.pop %v2084
    %v2213 = vtanh.pop %v2085
    %v2214 = vtanh.pop %v2086
    %v2215 = vtanh.pop %v2087
    %v2216 = vtanh.pop %v2088
    %v2217 = vtanh.pop %v2089
    %v2218 = vtanh.pop %v2090
    %v2219 = vtanh.pop %v2091
    %v2220 = vtanh.pop %v2092
    %v2221 = vtanh.pop %v2093
    %v2222 = vtanh.pop %v2094
    %v2223 = vtanh.pop %v2095
    %v2224 = vld [vmem:[%s5] sm:$0x1]
    %v2226 = vlaneseq
    %v2227 = vshrl.u32 %v2226, 7
    %v2228 = vsub.s32 0, %v2227
    %v2229 = vrot.slane %v2224, %v2228
    %v2231 = vmul.f32 %v2096, %v2229
    %v2232 = vmul.f32 %v2097, %v2229
    %v2233 = vmul.f32 %v2098, %v2229
    %v2234 = vmul.f32 %v2099, %v2229
    %v2235 = vmul.f32 %v2100, %v2229
    %v2236 = vmul.f32 %v2101, %v2229
    %v2237 = vmul.f32 %v2102, %v2229
    %v2238 = vmul.f32 %v2103, %v2229
    %v2239 = vmul.f32 %v2104, %v2229
    %v2240 = vmul.f32 %v2105, %v2229
    %v2241 = vmul.f32 %v2106, %v2229
    %v2242 = vmul.f32 %v2107, %v2229
    %v2243 = vmul.f32 %v2108, %v2229
    %v2244 = vmul.f32 %v2109, %v2229
    %v2245 = vmul.f32 %v2110, %v2229
    %v2246 = vmul.f32 %v2111, %v2229
    %v2247 = vmul.f32 %v2112, %v2229
    %v2248 = vmul.f32 %v2113, %v2229
    %v2249 = vmul.f32 %v2114, %v2229
    %v2250 = vmul.f32 %v2115, %v2229
    %v2251 = vmul.f32 %v2116, %v2229
    %v2252 = vmul.f32 %v2117, %v2229
    %v2253 = vmul.f32 %v2118, %v2229
    %v2254 = vmul.f32 %v2119, %v2229
    %v2255 = vmul.f32 %v2120, %v2229
    %v2256 = vmul.f32 %v2121, %v2229
    %v2257 = vmul.f32 %v2122, %v2229
    %v2258 = vmul.f32 %v2123, %v2229
    %v2259 = vmul.f32 %v2124, %v2229
    %v2260 = vmul.f32 %v2125, %v2229
    %v2261 = vmul.f32 %v2126, %v2229
    %v2262 = vmul.f32 %v2127, %v2229
    %v2263 = vmul.f32 %v2128, %v2229
    %v2264 = vmul.f32 %v2129, %v2229
    %v2265 = vmul.f32 %v2130, %v2229
    %v2266 = vmul.f32 %v2131, %v2229
    %v2267 = vmul.f32 %v2132, %v2229
    %v2268 = vmul.f32 %v2133, %v2229
    %v2269 = vmul.f32 %v2134, %v2229
    %v2270 = vmul.f32 %v2135, %v2229
    %v2271 = vmul.f32 %v2136, %v2229
    %v2272 = vmul.f32 %v2137, %v2229
    %v2273 = vmul.f32 %v2138, %v2229
    %v2274 = vmul.f32 %v2139, %v2229
    %v2275 = vmul.f32 %v2140, %v2229
    %v2276 = vmul.f32 %v2141, %v2229
    %v2277 = vmul.f32 %v2142, %v2229
    %v2278 = vmul.f32 %v2143, %v2229
    %v2279 = vmul.f32 %v2144, %v2229
    %v2280 = vmul.f32 %v2145, %v2229
    %v2281 = vmul.f32 %v2146, %v2229
    %v2282 = vmul.f32 %v2147, %v2229
    %v2283 = vmul.f32 %v2148, %v2229
    %v2284 = vmul.f32 %v2149, %v2229
    %v2285 = vmul.f32 %v2150, %v2229
    %v2286 = vmul.f32 %v2151, %v2229
    %v2287 = vmul.f32 %v2152, %v2229
    %v2288 = vmul.f32 %v2153, %v2229
    %v2289 = vmul.f32 %v2154, %v2229
    %v2290 = vmul.f32 %v2155, %v2229
    %v2291 = vmul.f32 %v2156, %v2229
    %v2292 = vmul.f32 %v2157, %v2229
    %v2293 = vmul.f32 %v2158, %v2229
    %v2294 = vmul.f32 %v2159, %v2229
    %v2295 = vmul.f32 %v2160, %v2229
    %v2296 = vmul.f32 %v2161, %v2229
    %v2297 = vmul.f32 %v2162, %v2229
    %v2298 = vmul.f32 %v2163, %v2229
    %v2299 = vmul.f32 %v2164, %v2229
    %v2300 = vmul.f32 %v2165, %v2229
    %v2301 = vmul.f32 %v2166, %v2229
    %v2302 = vmul.f32 %v2167, %v2229
    %v2303 = vmul.f32 %v2168, %v2229
    %v2304 = vmul.f32 %v2169, %v2229
    %v2305 = vmul.f32 %v2170, %v2229
    %v2306 = vmul.f32 %v2171, %v2229
    %v2307 = vmul.f32 %v2172, %v2229
    %v2308 = vmul.f32 %v2173, %v2229
    %v2309 = vmul.f32 %v2174, %v2229
    %v2310 = vmul.f32 %v2175, %v2229
    %v2311 = vmul.f32 %v2176, %v2229
    %v2312 = vmul.f32 %v2177, %v2229
    %v2313 = vmul.f32 %v2178, %v2229
    %v2314 = vmul.f32 %v2179, %v2229
    %v2315 = vmul.f32 %v2180, %v2229
    %v2316 = vmul.f32 %v2181, %v2229
    %v2317 = vmul.f32 %v2182, %v2229
    %v2318 = vmul.f32 %v2183, %v2229
    %v2319 = vmul.f32 %v2184, %v2229
    %v2320 = vmul.f32 %v2185, %v2229
    %v2321 = vmul.f32 %v2186, %v2229
    %v2322 = vmul.f32 %v2187, %v2229
    %v2323 = vmul.f32 %v2188, %v2229
    %v2324 = vmul.f32 %v2189, %v2229
    %v2325 = vmul.f32 %v2190, %v2229
    %v2326 = vmul.f32 %v2191, %v2229
    %v2327 = vmul.f32 %v2192, %v2229
    %v2328 = vmul.f32 %v2193, %v2229
    %v2329 = vmul.f32 %v2194, %v2229
    %v2330 = vmul.f32 %v2195, %v2229
    %v2331 = vmul.f32 %v2196, %v2229
    %v2332 = vmul.f32 %v2197, %v2229
    %v2333 = vmul.f32 %v2198, %v2229
    %v2334 = vmul.f32 %v2199, %v2229
    %v2335 = vmul.f32 %v2200, %v2229
    %v2336 = vmul.f32 %v2201, %v2229
    %v2337 = vmul.f32 %v2202, %v2229
    %v2338 = vmul.f32 %v2203, %v2229
    %v2339 = vmul.f32 %v2204, %v2229
    %v2340 = vmul.f32 %v2205, %v2229
    %v2341 = vmul.f32 %v2206, %v2229
    %v2342 = vmul.f32 %v2207, %v2229
    %v2343 = vmul.f32 %v2208, %v2229
    %v2344 = vmul.f32 %v2209, %v2229
    %v2345 = vmul.f32 %v2210, %v2229
    %v2346 = vmul.f32 %v2211, %v2229
    %v2347 = vmul.f32 %v2212, %v2229
    %v2348 = vmul.f32 %v2213, %v2229
    %v2349 = vmul.f32 %v2214, %v2229
    %v2350 = vmul.f32 %v2215, %v2229
    %v2351 = vmul.f32 %v2216, %v2229
    %v2352 = vmul.f32 %v2217, %v2229
    %v2353 = vmul.f32 %v2218, %v2229
    %v2354 = vmul.f32 %v2219, %v2229
    %v2355 = vmul.f32 %v2220, %v2229
    %v2356 = vmul.f32 %v2221, %v2229
    %v2357 = vmul.f32 %v2222, %v2229
    %v2358 = vmul.f32 %v2223, %v2229
    %vm2359 = vcmask 254976
    %v2360 = vsel %vm2359, %v2231, 0.0
    %2361 = vadd.xlane.f32.xlu0 %v2360
    %v2362 = vpop.xlane.xlu0 %2361
    %v2363 = vsel %vm2359, %v2232, 0.0
    %2364 = vadd.xlane.f32.xlu0 %v2363
    %v2365 = vpop.xlane.xlu0 %2364
    %v2366 = vsel %vm2359, %v2233, 0.0
    %2367 = vadd.xlane.f32.xlu0 %v2366
    %v2368 = vpop.xlane.xlu0 %2367
    %v2369 = vsel %vm2359, %v2234, 0.0
    %2370 = vadd.xlane.f32.xlu0 %v2369
    %v2371 = vpop.xlane.xlu0 %2370
    %v2372 = vsel %vm2359, %v2235, 0.0
    %2373 = vadd.xlane.f32.xlu0 %v2372
    %v2374 = vpop.xlane.xlu0 %2373
    %v2375 = vsel %vm2359, %v2236, 0.0
    %2376 = vadd.xlane.f32.xlu0 %v2375
    %v2377 = vpop.xlane.xlu0 %2376
    %v2378 = vsel %vm2359, %v2237, 0.0
    %2379 = vadd.xlane.f32.xlu0 %v2378
    %v2380 = vpop.xlane.xlu0 %2379
    %v2381 = vsel %vm2359, %v2238, 0.0
    %2382 = vadd.xlane.f32.xlu0 %v2381
    %v2383 = vpop.xlane.xlu0 %2382
    %v2384 = vsel %vm2359, %v2239, 0.0
    %2385 = vadd.xlane.f32.xlu0 %v2384
    %v2386 = vpop.xlane.xlu0 %2385
    %v2387 = vsel %vm2359, %v2240, 0.0
    %2388 = vadd.xlane.f32.xlu0 %v2387
    %v2389 = vpop.xlane.xlu0 %2388
    %v2390 = vsel %vm2359, %v2241, 0.0
    %2391 = vadd.xlane.f32.xlu0 %v2390
    %v2392 = vpop.xlane.xlu0 %2391
    %v2393 = vsel %vm2359, %v2242, 0.0
    %2394 = vadd.xlane.f32.xlu0 %v2393
    %v2395 = vpop.xlane.xlu0 %2394
    %v2396 = vsel %vm2359, %v2243, 0.0
    %2397 = vadd.xlane.f32.xlu0 %v2396
    %v2398 = vpop.xlane.xlu0 %2397
    %v2399 = vsel %vm2359, %v2244, 0.0
    %2400 = vadd.xlane.f32.xlu0 %v2399
    %v2401 = vpop.xlane.xlu0 %2400
    %v2402 = vsel %vm2359, %v2245, 0.0
    %2403 = vadd.xlane.f32.xlu0 %v2402
    %v2404 = vpop.xlane.xlu0 %2403
    %v2405 = vsel %vm2359, %v2246, 0.0
    %2406 = vadd.xlane.f32.xlu0 %v2405
    %v2407 = vpop.xlane.xlu0 %2406
    %v2408 = vsel %vm2359, %v2247, 0.0
    %2409 = vadd.xlane.f32.xlu0 %v2408
    %v2410 = vpop.xlane.xlu0 %2409
    %v2411 = vsel %vm2359, %v2248, 0.0
    %2412 = vadd.xlane.f32.xlu0 %v2411
    %v2413 = vpop.xlane.xlu0 %2412
    %v2414 = vsel %vm2359, %v2249, 0.0
    %2415 = vadd.xlane.f32.xlu0 %v2414
    %v2416 = vpop.xlane.xlu0 %2415
    %v2417 = vsel %vm2359, %v2250, 0.0
    %2418 = vadd.xlane.f32.xlu0 %v2417
    %v2419 = vpop.xlane.xlu0 %2418
    %v2420 = vsel %vm2359, %v2251, 0.0
    %2421 = vadd.xlane.f32.xlu0 %v2420
    %v2422 = vpop.xlane.xlu0 %2421
    %v2423 = vsel %vm2359, %v2252, 0.0
    %2424 = vadd.xlane.f32.xlu0 %v2423
    %v2425 = vpop.xlane.xlu0 %2424
    %v2426 = vsel %vm2359, %v2253, 0.0
    %2427 = vadd.xlane.f32.xlu0 %v2426
    %v2428 = vpop.xlane.xlu0 %2427
    %v2429 = vsel %vm2359, %v2254, 0.0
    %2430 = vadd.xlane.f32.xlu0 %v2429
    %v2431 = vpop.xlane.xlu0 %2430
    %v2432 = vsel %vm2359, %v2255, 0.0
    %2433 = vadd.xlane.f32.xlu0 %v2432
    %v2434 = vpop.xlane.xlu0 %2433
    %v2435 = vsel %vm2359, %v2256, 0.0
    %2436 = vadd.xlane.f32.xlu0 %v2435
    %v2437 = vpop.xlane.xlu0 %2436
    %v2438 = vsel %vm2359, %v2257, 0.0
    %2439 = vadd.xlane.f32.xlu0 %v2438
    %v2440 = vpop.xlane.xlu0 %2439
    %v2441 = vsel %vm2359, %v2258, 0.0
    %2442 = vadd.xlane.f32.xlu0 %v2441
    %v2443 = vpop.xlane.xlu0 %2442
    %v2444 = vsel %vm2359, %v2259, 0.0
    %2445 = vadd.xlane.f32.xlu0 %v2444
    %v2446 = vpop.xlane.xlu0 %2445
    %v2447 = vsel %vm2359, %v2260, 0.0
    %2448 = vadd.xlane.f32.xlu0 %v2447
    %v2449 = vpop.xlane.xlu0 %2448
    %v2450 = vsel %vm2359, %v2261, 0.0
    %2451 = vadd.xlane.f32.xlu0 %v2450
    %v2452 = vpop.xlane.xlu0 %2451
    %v2453 = vsel %vm2359, %v2262, 0.0
    %2454 = vadd.xlane.f32.xlu0 %v2453
    %v2455 = vpop.xlane.xlu0 %2454
    %v2456 = vsel %vm2359, %v2263, 0.0
    %2457 = vadd.xlane.f32.xlu0 %v2456
    %v2458 = vpop.xlane.xlu0 %2457
    %v2459 = vsel %vm2359, %v2264, 0.0
    %2460 = vadd.xlane.f32.xlu0 %v2459
    %v2461 = vpop.xlane.xlu0 %2460
    %v2462 = vsel %vm2359, %v2265, 0.0
    %2463 = vadd.xlane.f32.xlu0 %v2462
    %v2464 = vpop.xlane.xlu0 %2463
    %v2465 = vsel %vm2359, %v2266, 0.0
    %2466 = vadd.xlane.f32.xlu0 %v2465
    %v2467 = vpop.xlane.xlu0 %2466
    %v2468 = vsel %vm2359, %v2267, 0.0
    %2469 = vadd.xlane.f32.xlu0 %v2468
    %v2470 = vpop.xlane.xlu0 %2469
    %v2471 = vsel %vm2359, %v2268, 0.0
    %2472 = vadd.xlane.f32.xlu0 %v2471
    %v2473 = vpop.xlane.xlu0 %2472
    %v2474 = vsel %vm2359, %v2269, 0.0
    %2475 = vadd.xlane.f32.xlu0 %v2474
    %v2476 = vpop.xlane.xlu0 %2475
    %v2477 = vsel %vm2359, %v2270, 0.0
    %2478 = vadd.xlane.f32.xlu0 %v2477
    %v2479 = vpop.xlane.xlu0 %2478
    %v2480 = vsel %vm2359, %v2271, 0.0
    %2481 = vadd.xlane.f32.xlu0 %v2480
    %v2482 = vpop.xlane.xlu0 %2481
    %v2483 = vsel %vm2359, %v2272, 0.0
    %2484 = vadd.xlane.f32.xlu0 %v2483
    %v2485 = vpop.xlane.xlu0 %2484
    %v2486 = vsel %vm2359, %v2273, 0.0
    %2487 = vadd.xlane.f32.xlu0 %v2486
    %v2488 = vpop.xlane.xlu0 %2487
    %v2489 = vsel %vm2359, %v2274, 0.0
    %2490 = vadd.xlane.f32.xlu0 %v2489
    %v2491 = vpop.xlane.xlu0 %2490
    %v2492 = vsel %vm2359, %v2275, 0.0
    %2493 = vadd.xlane.f32.xlu0 %v2492
    %v2494 = vpop.xlane.xlu0 %2493
    %v2495 = vsel %vm2359, %v2276, 0.0
    %2496 = vadd.xlane.f32.xlu0 %v2495
    %v2497 = vpop.xlane.xlu0 %2496
    %v2498 = vsel %vm2359, %v2277, 0.0
    %2499 = vadd.xlane.f32.xlu0 %v2498
    %v2500 = vpop.xlane.xlu0 %2499
    %v2501 = vsel %vm2359, %v2278, 0.0
    %2502 = vadd.xlane.f32.xlu0 %v2501
    %v2503 = vpop.xlane.xlu0 %2502
    %v2504 = vsel %vm2359, %v2279, 0.0
    %2505 = vadd.xlane.f32.xlu0 %v2504
    %v2506 = vpop.xlane.xlu0 %2505
    %v2507 = vsel %vm2359, %v2280, 0.0
    %2508 = vadd.xlane.f32.xlu0 %v2507
    %v2509 = vpop.xlane.xlu0 %2508
    %v2510 = vsel %vm2359, %v2281, 0.0
    %2511 = vadd.xlane.f32.xlu0 %v2510
    %v2512 = vpop.xlane.xlu0 %2511
    %v2513 = vsel %vm2359, %v2282, 0.0
    %2514 = vadd.xlane.f32.xlu0 %v2513
    %v2515 = vpop.xlane.xlu0 %2514
    %v2516 = vsel %vm2359, %v2283, 0.0
    %2517 = vadd.xlane.f32.xlu0 %v2516
    %v2518 = vpop.xlane.xlu0 %2517
    %v2519 = vsel %vm2359, %v2284, 0.0
    %2520 = vadd.xlane.f32.xlu0 %v2519
    %v2521 = vpop.xlane.xlu0 %2520
    %v2522 = vsel %vm2359, %v2285, 0.0
    %2523 = vadd.xlane.f32.xlu0 %v2522
    %v2524 = vpop.xlane.xlu0 %2523
    %v2525 = vsel %vm2359, %v2286, 0.0
    %2526 = vadd.xlane.f32.xlu0 %v2525
    %v2527 = vpop.xlane.xlu0 %2526
    %v2528 = vsel %vm2359, %v2287, 0.0
    %2529 = vadd.xlane.f32.xlu0 %v2528
    %v2530 = vpop.xlane.xlu0 %2529
    %v2531 = vsel %vm2359, %v2288, 0.0
    %2532 = vadd.xlane.f32.xlu0 %v2531
    %v2533 = vpop.xlane.xlu0 %2532
    %v2534 = vsel %vm2359, %v2289, 0.0
    %2535 = vadd.xlane.f32.xlu0 %v2534
    %v2536 = vpop.xlane.xlu0 %2535
    %v2537 = vsel %vm2359, %v2290, 0.0
    %2538 = vadd.xlane.f32.xlu0 %v2537
    %v2539 = vpop.xlane.xlu0 %2538
    %v2540 = vsel %vm2359, %v2291, 0.0
    %2541 = vadd.xlane.f32.xlu0 %v2540
    %v2542 = vpop.xlane.xlu0 %2541
    %v2543 = vsel %vm2359, %v2292, 0.0
    %2544 = vadd.xlane.f32.xlu0 %v2543
    %v2545 = vpop.xlane.xlu0 %2544
    %v2546 = vsel %vm2359, %v2293, 0.0
    %2547 = vadd.xlane.f32.xlu0 %v2546
    %v2548 = vpop.xlane.xlu0 %2547
    %v2549 = vsel %vm2359, %v2294, 0.0
    %2550 = vadd.xlane.f32.xlu0 %v2549
    %v2551 = vpop.xlane.xlu0 %2550
    %v2552 = vsel %vm2359, %v2295, 0.0
    %2553 = vadd.xlane.f32.xlu0 %v2552
    %v2554 = vpop.xlane.xlu0 %2553
    %v2555 = vsel %vm2359, %v2296, 0.0
    %2556 = vadd.xlane.f32.xlu0 %v2555
    %v2557 = vpop.xlane.xlu0 %2556
    %v2558 = vsel %vm2359, %v2297, 0.0
    %2559 = vadd.xlane.f32.xlu0 %v2558
    %v2560 = vpop.xlane.xlu0 %2559
    %v2561 = vsel %vm2359, %v2298, 0.0
    %2562 = vadd.xlane.f32.xlu0 %v2561
    %v2563 = vpop.xlane.xlu0 %2562
    %v2564 = vsel %vm2359, %v2299, 0.0
    %2565 = vadd.xlane.f32.xlu0 %v2564
    %v2566 = vpop.xlane.xlu0 %2565
    %v2567 = vsel %vm2359, %v2300, 0.0
    %2568 = vadd.xlane.f32.xlu0 %v2567
    %v2569 = vpop.xlane.xlu0 %2568
    %v2570 = vsel %vm2359, %v2301, 0.0
    %2571 = vadd.xlane.f32.xlu0 %v2570
    %v2572 = vpop.xlane.xlu0 %2571
    %v2573 = vsel %vm2359, %v2302, 0.0
    %2574 = vadd.xlane.f32.xlu0 %v2573
    %v2575 = vpop.xlane.xlu0 %2574
    %v2576 = vsel %vm2359, %v2303, 0.0
    %2577 = vadd.xlane.f32.xlu0 %v2576
    %v2578 = vpop.xlane.xlu0 %2577
    %v2579 = vsel %vm2359, %v2304, 0.0
    %2580 = vadd.xlane.f32.xlu0 %v2579
    %v2581 = vpop.xlane.xlu0 %2580
    %v2582 = vsel %vm2359, %v2305, 0.0
    %2583 = vadd.xlane.f32.xlu0 %v2582
    %v2584 = vpop.xlane.xlu0 %2583
    %v2585 = vsel %vm2359, %v2306, 0.0
    %2586 = vadd.xlane.f32.xlu0 %v2585
    %v2587 = vpop.xlane.xlu0 %2586
    %v2588 = vsel %vm2359, %v2307, 0.0
    %2589 = vadd.xlane.f32.xlu0 %v2588
    %v2590 = vpop.xlane.xlu0 %2589
    %v2591 = vsel %vm2359, %v2308, 0.0
    %2592 = vadd.xlane.f32.xlu0 %v2591
    %v2593 = vpop.xlane.xlu0 %2592
    %v2594 = vsel %vm2359, %v2309, 0.0
    %2595 = vadd.xlane.f32.xlu0 %v2594
    %v2596 = vpop.xlane.xlu0 %2595
    %v2597 = vsel %vm2359, %v2310, 0.0
    %2598 = vadd.xlane.f32.xlu0 %v2597
    %v2599 = vpop.xlane.xlu0 %2598
    %v2600 = vsel %vm2359, %v2311, 0.0
    %2601 = vadd.xlane.f32.xlu0 %v2600
    %v2602 = vpop.xlane.xlu0 %2601
    %v2603 = vsel %vm2359, %v2312, 0.0
    %2604 = vadd.xlane.f32.xlu0 %v2603
    %v2605 = vpop.xlane.xlu0 %2604
    %v2606 = vsel %vm2359, %v2313, 0.0
    %2607 = vadd.xlane.f32.xlu0 %v2606
    %v2608 = vpop.xlane.xlu0 %2607
    %v2609 = vsel %vm2359, %v2314, 0.0
    %2610 = vadd.xlane.f32.xlu0 %v2609
    %v2611 = vpop.xlane.xlu0 %2610
    %v2612 = vsel %vm2359, %v2315, 0.0
    %2613 = vadd.xlane.f32.xlu0 %v2612
    %v2614 = vpop.xlane.xlu0 %2613
    %v2615 = vsel %vm2359, %v2316, 0.0
    %2616 = vadd.xlane.f32.xlu0 %v2615
    %v2617 = vpop.xlane.xlu0 %2616
    %v2618 = vsel %vm2359, %v2317, 0.0
    %2619 = vadd.xlane.f32.xlu0 %v2618
    %v2620 = vpop.xlane.xlu0 %2619
    %v2621 = vsel %vm2359, %v2318, 0.0
    %2622 = vadd.xlane.f32.xlu0 %v2621
    %v2623 = vpop.xlane.xlu0 %2622
    %v2624 = vsel %vm2359, %v2319, 0.0
    %2625 = vadd.xlane.f32.xlu0 %v2624
    %v2626 = vpop.xlane.xlu0 %2625
    %v2627 = vsel %vm2359, %v2320, 0.0
    %2628 = vadd.xlane.f32.xlu0 %v2627
    %v2629 = vpop.xlane.xlu0 %2628
    %v2630 = vsel %vm2359, %v2321, 0.0
    %2631 = vadd.xlane.f32.xlu0 %v2630
    %v2632 = vpop.xlane.xlu0 %2631
    %v2633 = vsel %vm2359, %v2322, 0.0
    %2634 = vadd.xlane.f32.xlu0 %v2633
    %v2635 = vpop.xlane.xlu0 %2634
    %v2636 = vsel %vm2359, %v2323, 0.0
    %2637 = vadd.xlane.f32.xlu0 %v2636
    %v2638 = vpop.xlane.xlu0 %2637
    %v2639 = vsel %vm2359, %v2324, 0.0
    %2640 = vadd.xlane.f32.xlu0 %v2639
    %v2641 = vpop.xlane.xlu0 %2640
    %v2642 = vsel %vm2359, %v2325, 0.0
    %2643 = vadd.xlane.f32.xlu0 %v2642
    %v2644 = vpop.xlane.xlu0 %2643
    %v2645 = vsel %vm2359, %v2326, 0.0
    %2646 = vadd.xlane.f32.xlu0 %v2645
    %v2647 = vpop.xlane.xlu0 %2646
    %v2648 = vsel %vm2359, %v2327, 0.0
    %2649 = vadd.xlane.f32.xlu0 %v2648
    %v2650 = vpop.xlane.xlu0 %2649
    %v2651 = vsel %vm2359, %v2328, 0.0
    %2652 = vadd.xlane.f32.xlu0 %v2651
    %v2653 = vpop.xlane.xlu0 %2652
    %v2654 = vsel %vm2359, %v2329, 0.0
    %2655 = vadd.xlane.f32.xlu0 %v2654
    %v2656 = vpop.xlane.xlu0 %2655
    %v2657 = vsel %vm2359, %v2330, 0.0
    %2658 = vadd.xlane.f32.xlu0 %v2657
    %v2659 = vpop.xlane.xlu0 %2658
    %v2660 = vsel %vm2359, %v2331, 0.0
    %2661 = vadd.xlane.f32.xlu0 %v2660
    %v2662 = vpop.xlane.xlu0 %2661
    %v2663 = vsel %vm2359, %v2332, 0.0
    %2664 = vadd.xlane.f32.xlu0 %v2663
    %v2665 = vpop.xlane.xlu0 %2664
    %v2666 = vsel %vm2359, %v2333, 0.0
    %2667 = vadd.xlane.f32.xlu0 %v2666
    %v2668 = vpop.xlane.xlu0 %2667
    %v2669 = vsel %vm2359, %v2334, 0.0
    %2670 = vadd.xlane.f32.xlu0 %v2669
    %v2671 = vpop.xlane.xlu0 %2670
    %v2672 = vsel %vm2359, %v2335, 0.0
    %2673 = vadd.xlane.f32.xlu0 %v2672
    %v2674 = vpop.xlane.xlu0 %2673
    %v2675 = vsel %vm2359, %v2336, 0.0
    %2676 = vadd.xlane.f32.xlu0 %v2675
    %v2677 = vpop.xlane.xlu0 %2676
    %v2678 = vsel %vm2359, %v2337, 0.0
    %2679 = vadd.xlane.f32.xlu0 %v2678
    %v2680 = vpop.xlane.xlu0 %2679
    %v2681 = vsel %vm2359, %v2338, 0.0
    %2682 = vadd.xlane.f32.xlu0 %v2681
    %v2683 = vpop.xlane.xlu0 %2682
    %v2684 = vsel %vm2359, %v2339, 0.0
    %2685 = vadd.xlane.f32.xlu0 %v2684
    %v2686 = vpop.xlane.xlu0 %2685
    %v2687 = vsel %vm2359, %v2340, 0.0
    %2688 = vadd.xlane.f32.xlu0 %v2687
    %v2689 = vpop.xlane.xlu0 %2688
    %v2690 = vsel %vm2359, %v2341, 0.0
    %2691 = vadd.xlane.f32.xlu0 %v2690
    %v2692 = vpop.xlane.xlu0 %2691
    %v2693 = vsel %vm2359, %v2342, 0.0
    %2694 = vadd.xlane.f32.xlu0 %v2693
    %v2695 = vpop.xlane.xlu0 %2694
    %v2696 = vsel %vm2359, %v2343, 0.0
    %2697 = vadd.xlane.f32.xlu0 %v2696
    %v2698 = vpop.xlane.xlu0 %2697
    %v2699 = vsel %vm2359, %v2344, 0.0
    %2700 = vadd.xlane.f32.xlu0 %v2699
    %v2701 = vpop.xlane.xlu0 %2700
    %v2702 = vsel %vm2359, %v2345, 0.0
    %2703 = vadd.xlane.f32.xlu0 %v2702
    %v2704 = vpop.xlane.xlu0 %2703
    %v2705 = vsel %vm2359, %v2346, 0.0
    %2706 = vadd.xlane.f32.xlu0 %v2705
    %v2707 = vpop.xlane.xlu0 %2706
    %v2708 = vsel %vm2359, %v2347, 0.0
    %2709 = vadd.xlane.f32.xlu0 %v2708
    %v2710 = vpop.xlane.xlu0 %2709
    %v2711 = vsel %vm2359, %v2348, 0.0
    %2712 = vadd.xlane.f32.xlu0 %v2711
    %v2713 = vpop.xlane.xlu0 %2712
    %v2714 = vsel %vm2359, %v2349, 0.0
    %2715 = vadd.xlane.f32.xlu0 %v2714
    %v2716 = vpop.xlane.xlu0 %2715
    %v2717 = vsel %vm2359, %v2350, 0.0
    %2718 = vadd.xlane.f32.xlu0 %v2717
    %v2719 = vpop.xlane.xlu0 %2718
    %v2720 = vsel %vm2359, %v2351, 0.0
    %2721 = vadd.xlane.f32.xlu0 %v2720
    %v2722 = vpop.xlane.xlu0 %2721
    %v2723 = vsel %vm2359, %v2352, 0.0
    %2724 = vadd.xlane.f32.xlu0 %v2723
    %v2725 = vpop.xlane.xlu0 %2724
    %v2726 = vsel %vm2359, %v2353, 0.0
    %2727 = vadd.xlane.f32.xlu0 %v2726
    %v2728 = vpop.xlane.xlu0 %2727
    %v2729 = vsel %vm2359, %v2354, 0.0
    %2730 = vadd.xlane.f32.xlu0 %v2729
    %v2731 = vpop.xlane.xlu0 %2730
    %v2732 = vsel %vm2359, %v2355, 0.0
    %2733 = vadd.xlane.f32.xlu0 %v2732
    %v2734 = vpop.xlane.xlu0 %2733
    %v2735 = vsel %vm2359, %v2356, 0.0
    %2736 = vadd.xlane.f32.xlu0 %v2735
    %v2737 = vpop.xlane.xlu0 %2736
    %v2738 = vsel %vm2359, %v2357, 0.0
    %2739 = vadd.xlane.f32.xlu0 %v2738
    %v2740 = vpop.xlane.xlu0 %2739
    %v2741 = vsel %vm2359, %v2358, 0.0
    %2742 = vadd.xlane.f32.xlu0 %v2741
    %v2743 = vpop.xlane.xlu0 %2742
    %s2744 = smul.u32 0, 128
    %v2873 = vlaneseq
    %v2874 = vand.u32 %v2873, 127
    %v2875 = vlaneseq
    %v2876 = vshrl.u32 %v2875, 7
    %v2877 = vsub.s32 %v2874, %v2876
    %v2878 = vrot.slane %v2362, %v2877
    %v2879 = vlaneseq
    %v2880 = vshrl.u32 %v2879, 7
    %v2881 = vsub.s32 %v2874, %v2880
    %v2882 = vrot.slane %v2365, %v2881
    %v2883 = vlaneseq
    %v2884 = vshrl.u32 %v2883, 7
    %v2885 = vsub.s32 %v2874, %v2884
    %v2886 = vrot.slane %v2368, %v2885
    %v2887 = vlaneseq
    %v2888 = vshrl.u32 %v2887, 7
    %v2889 = vsub.s32 %v2874, %v2888
    %v2890 = vrot.slane %v2371, %v2889
    %v2891 = vlaneseq
    %v2892 = vshrl.u32 %v2891, 7
    %v2893 = vsub.s32 %v2874, %v2892
    %v2894 = vrot.slane %v2374, %v2893
    %v2895 = vlaneseq
    %v2896 = vshrl.u32 %v2895, 7
    %v2897 = vsub.s32 %v2874, %v2896
    %v2898 = vrot.slane %v2377, %v2897
    %v2899 = vlaneseq
    %v2900 = vshrl.u32 %v2899, 7
    %v2901 = vsub.s32 %v2874, %v2900
    %v2902 = vrot.slane %v2380, %v2901
    %v2903 = vlaneseq
    %v2904 = vshrl.u32 %v2903, 7
    %v2905 = vsub.s32 %v2874, %v2904
    %v2906 = vrot.slane %v2383, %v2905
    %v2907 = vlaneseq
    %v2908 = vshrl.u32 %v2907, 7
    %v2909 = vsub.s32 %v2874, %v2908
    %v2910 = vrot.slane %v2386, %v2909
    %v2911 = vlaneseq
    %v2912 = vshrl.u32 %v2911, 7
    %v2913 = vsub.s32 %v2874, %v2912
    %v2914 = vrot.slane %v2389, %v2913
    %v2915 = vlaneseq
    %v2916 = vshrl.u32 %v2915, 7
    %v2917 = vsub.s32 %v2874, %v2916
    %v2918 = vrot.slane %v2392, %v2917
    %v2919 = vlaneseq
    %v2920 = vshrl.u32 %v2919, 7
    %v2921 = vsub.s32 %v2874, %v2920
    %v2922 = vrot.slane %v2395, %v2921
    %v2923 = vlaneseq
    %v2924 = vshrl.u32 %v2923, 7
    %v2925 = vsub.s32 %v2874, %v2924
    %v2926 = vrot.slane %v2398, %v2925
    %v2927 = vlaneseq
    %v2928 = vshrl.u32 %v2927, 7
    %v2929 = vsub.s32 %v2874, %v2928
    %v2930 = vrot.slane %v2401, %v2929
    %v2931 = vlaneseq
    %v2932 = vshrl.u32 %v2931, 7
    %v2933 = vsub.s32 %v2874, %v2932
    %v2934 = vrot.slane %v2404, %v2933
    %v2935 = vlaneseq
    %v2936 = vshrl.u32 %v2935, 7
    %v2937 = vsub.s32 %v2874, %v2936
    %v2938 = vrot.slane %v2407, %v2937
    %v2939 = vlaneseq
    %v2940 = vshrl.u32 %v2939, 7
    %v2941 = vsub.s32 %v2874, %v2940
    %v2942 = vrot.slane %v2410, %v2941
    %v2943 = vlaneseq
    %v2944 = vshrl.u32 %v2943, 7
    %v2945 = vsub.s32 %v2874, %v2944
    %v2946 = vrot.slane %v2413, %v2945
    %v2947 = vlaneseq
    %v2948 = vshrl.u32 %v2947, 7
    %v2949 = vsub.s32 %v2874, %v2948
    %v2950 = vrot.slane %v2416, %v2949
    %v2951 = vlaneseq
    %v2952 = vshrl.u32 %v2951, 7
    %v2953 = vsub.s32 %v2874, %v2952
    %v2954 = vrot.slane %v2419, %v2953
    %v2955 = vlaneseq
    %v2956 = vshrl.u32 %v2955, 7
    %v2957 = vsub.s32 %v2874, %v2956
    %v2958 = vrot.slane %v2422, %v2957
    %v2959 = vlaneseq
    %v2960 = vshrl.u32 %v2959, 7
    %v2961 = vsub.s32 %v2874, %v2960
    %v2962 = vrot.slane %v2425, %v2961
    %v2963 = vlaneseq
    %v2964 = vshrl.u32 %v2963, 7
    %v2965 = vsub.s32 %v2874, %v2964
    %v2966 = vrot.slane %v2428, %v2965
    %v2967 = vlaneseq
    %v2968 = vshrl.u32 %v2967, 7
    %v2969 = vsub.s32 %v2874, %v2968
    %v2970 = vrot.slane %v2431, %v2969
    %v2971 = vlaneseq
    %v2972 = vshrl.u32 %v2971, 7
    %v2973 = vsub.s32 %v2874, %v2972
    %v2974 = vrot.slane %v2434, %v2973
    %v2975 = vlaneseq
    %v2976 = vshrl.u32 %v2975, 7
    %v2977 = vsub.s32 %v2874, %v2976
    %v2978 = vrot.slane %v2437, %v2977
    %v2979 = vlaneseq
    %v2980 = vshrl.u32 %v2979, 7
    %v2981 = vsub.s32 %v2874, %v2980
    %v2982 = vrot.slane %v2440, %v2981
    %v2983 = vlaneseq
    %v2984 = vshrl.u32 %v2983, 7
    %v2985 = vsub.s32 %v2874, %v2984
    %v2986 = vrot.slane %v2443, %v2985
    %v2987 = vlaneseq
    %v2988 = vshrl.u32 %v2987, 7
    %v2989 = vsub.s32 %v2874, %v2988
    %v2990 = vrot.slane %v2446, %v2989
    %v2991 = vlaneseq
    %v2992 = vshrl.u32 %v2991, 7
    %v2993 = vsub.s32 %v2874, %v2992
    %v2994 = vrot.slane %v2449, %v2993
    %v2995 = vlaneseq
    %v2996 = vshrl.u32 %v2995, 7
    %v2997 = vsub.s32 %v2874, %v2996
    %v2998 = vrot.slane %v2452, %v2997
    %v2999 = vlaneseq
    %v3000 = vshrl.u32 %v2999, 7
    %v3001 = vsub.s32 %v2874, %v3000
    %v3002 = vrot.slane %v2455, %v3001
    %v3003 = vlaneseq
    %v3004 = vshrl.u32 %v3003, 7
    %v3005 = vsub.s32 %v2874, %v3004
    %v3006 = vrot.slane %v2458, %v3005
    %v3007 = vlaneseq
    %v3008 = vshrl.u32 %v3007, 7
    %v3009 = vsub.s32 %v2874, %v3008
    %v3010 = vrot.slane %v2461, %v3009
    %v3011 = vlaneseq
    %v3012 = vshrl.u32 %v3011, 7
    %v3013 = vsub.s32 %v2874, %v3012
    %v3014 = vrot.slane %v2464, %v3013
    %v3015 = vlaneseq
    %v3016 = vshrl.u32 %v3015, 7
    %v3017 = vsub.s32 %v2874, %v3016
    %v3018 = vrot.slane %v2467, %v3017
    %v3019 = vlaneseq
    %v3020 = vshrl.u32 %v3019, 7
    %v3021 = vsub.s32 %v2874, %v3020
    %v3022 = vrot.slane %v2470, %v3021
    %v3023 = vlaneseq
    %v3024 = vshrl.u32 %v3023, 7
    %v3025 = vsub.s32 %v2874, %v3024
    %v3026 = vrot.slane %v2473, %v3025
    %v3027 = vlaneseq
    %v3028 = vshrl.u32 %v3027, 7
    %v3029 = vsub.s32 %v2874, %v3028
    %v3030 = vrot.slane %v2476, %v3029
    %v3031 = vlaneseq
    %v3032 = vshrl.u32 %v3031, 7
    %v3033 = vsub.s32 %v2874, %v3032
    %v3034 = vrot.slane %v2479, %v3033
    %v3035 = vlaneseq
    %v3036 = vshrl.u32 %v3035, 7
    %v3037 = vsub.s32 %v2874, %v3036
    %v3038 = vrot.slane %v2482, %v3037
    %v3039 = vlaneseq
    %v3040 = vshrl.u32 %v3039, 7
    %v3041 = vsub.s32 %v2874, %v3040
    %v3042 = vrot.slane %v2485, %v3041
    %v3043 = vlaneseq
    %v3044 = vshrl.u32 %v3043, 7
    %v3045 = vsub.s32 %v2874, %v3044
    %v3046 = vrot.slane %v2488, %v3045
    %v3047 = vlaneseq
    %v3048 = vshrl.u32 %v3047, 7
    %v3049 = vsub.s32 %v2874, %v3048
    %v3050 = vrot.slane %v2491, %v3049
    %v3051 = vlaneseq
    %v3052 = vshrl.u32 %v3051, 7
    %v3053 = vsub.s32 %v2874, %v3052
    %v3054 = vrot.slane %v2494, %v3053
    %v3055 = vlaneseq
    %v3056 = vshrl.u32 %v3055, 7
    %v3057 = vsub.s32 %v2874, %v3056
    %v3058 = vrot.slane %v2497, %v3057
    %v3059 = vlaneseq
    %v3060 = vshrl.u32 %v3059, 7
    %v3061 = vsub.s32 %v2874, %v3060
    %v3062 = vrot.slane %v2500, %v3061
    %v3063 = vlaneseq
    %v3064 = vshrl.u32 %v3063, 7
    %v3065 = vsub.s32 %v2874, %v3064
    %v3066 = vrot.slane %v2503, %v3065
    %v3067 = vlaneseq
    %v3068 = vshrl.u32 %v3067, 7
    %v3069 = vsub.s32 %v2874, %v3068
    %v3070 = vrot.slane %v2506, %v3069
    %v3071 = vlaneseq
    %v3072 = vshrl.u32 %v3071, 7
    %v3073 = vsub.s32 %v2874, %v3072
    %v3074 = vrot.slane %v2509, %v3073
    %v3075 = vlaneseq
    %v3076 = vshrl.u32 %v3075, 7
    %v3077 = vsub.s32 %v2874, %v3076
    %v3078 = vrot.slane %v2512, %v3077
    %v3079 = vlaneseq
    %v3080 = vshrl.u32 %v3079, 7
    %v3081 = vsub.s32 %v2874, %v3080
    %v3082 = vrot.slane %v2515, %v3081
    %v3083 = vlaneseq
    %v3084 = vshrl.u32 %v3083, 7
    %v3085 = vsub.s32 %v2874, %v3084
    %v3086 = vrot.slane %v2518, %v3085
    %v3087 = vlaneseq
    %v3088 = vshrl.u32 %v3087, 7
    %v3089 = vsub.s32 %v2874, %v3088
    %v3090 = vrot.slane %v2521, %v3089
    %v3091 = vlaneseq
    %v3092 = vshrl.u32 %v3091, 7
    %v3093 = vsub.s32 %v2874, %v3092
    %v3094 = vrot.slane %v2524, %v3093
    %v3095 = vlaneseq
    %v3096 = vshrl.u32 %v3095, 7
    %v3097 = vsub.s32 %v2874, %v3096
    %v3098 = vrot.slane %v2527, %v3097
    %v3099 = vlaneseq
    %v3100 = vshrl.u32 %v3099, 7
    %v3101 = vsub.s32 %v2874, %v3100
    %v3102 = vrot.slane %v2530, %v3101
    %v3103 = vlaneseq
    %v3104 = vshrl.u32 %v3103, 7
    %v3105 = vsub.s32 %v2874, %v3104
    %v3106 = vrot.slane %v2533, %v3105
    %v3107 = vlaneseq
    %v3108 = vshrl.u32 %v3107, 7
    %v3109 = vsub.s32 %v2874, %v3108
    %v3110 = vrot.slane %v2536, %v3109
    %v3111 = vlaneseq
    %v3112 = vshrl.u32 %v3111, 7
    %v3113 = vsub.s32 %v2874, %v3112
    %v3114 = vrot.slane %v2539, %v3113
    %v3115 = vlaneseq
    %v3116 = vshrl.u32 %v3115, 7
    %v3117 = vsub.s32 %v2874, %v3116
    %v3118 = vrot.slane %v2542, %v3117
    %v3119 = vlaneseq
    %v3120 = vshrl.u32 %v3119, 7
    %v3121 = vsub.s32 %v2874, %v3120
    %v3122 = vrot.slane %v2545, %v3121
    %v3123 = vlaneseq
    %v3124 = vshrl.u32 %v3123, 7
    %v3125 = vsub.s32 %v2874, %v3124
    %v3126 = vrot.slane %v2548, %v3125
    %v3127 = vlaneseq
    %v3128 = vshrl.u32 %v3127, 7
    %v3129 = vsub.s32 %v2874, %v3128
    %v3130 = vrot.slane %v2551, %v3129
    %v3131 = vlaneseq
    %v3132 = vshrl.u32 %v3131, 7
    %v3133 = vsub.s32 %v2874, %v3132
    %v3134 = vrot.slane %v2554, %v3133
    %v3135 = vlaneseq
    %v3136 = vshrl.u32 %v3135, 7
    %v3137 = vsub.s32 %v2874, %v3136
    %v3138 = vrot.slane %v2557, %v3137
    %v3139 = vlaneseq
    %v3140 = vshrl.u32 %v3139, 7
    %v3141 = vsub.s32 %v2874, %v3140
    %v3142 = vrot.slane %v2560, %v3141
    %v3143 = vlaneseq
    %v3144 = vshrl.u32 %v3143, 7
    %v3145 = vsub.s32 %v2874, %v3144
    %v3146 = vrot.slane %v2563, %v3145
    %v3147 = vlaneseq
    %v3148 = vshrl.u32 %v3147, 7
    %v3149 = vsub.s32 %v2874, %v3148
    %v3150 = vrot.slane %v2566, %v3149
    %v3151 = vlaneseq
    %v3152 = vshrl.u32 %v3151, 7
    %v3153 = vsub.s32 %v2874, %v3152
    %v3154 = vrot.slane %v2569, %v3153
    %v3155 = vlaneseq
    %v3156 = vshrl.u32 %v3155, 7
    %v3157 = vsub.s32 %v2874, %v3156
    %v3158 = vrot.slane %v2572, %v3157
    %v3159 = vlaneseq
    %v3160 = vshrl.u32 %v3159, 7
    %v3161 = vsub.s32 %v2874, %v3160
    %v3162 = vrot.slane %v2575, %v3161
    %v3163 = vlaneseq
    %v3164 = vshrl.u32 %v3163, 7
    %v3165 = vsub.s32 %v2874, %v3164
    %v3166 = vrot.slane %v2578, %v3165
    %v3167 = vlaneseq
    %v3168 = vshrl.u32 %v3167, 7
    %v3169 = vsub.s32 %v2874, %v3168
    %v3170 = vrot.slane %v2581, %v3169
    %v3171 = vlaneseq
    %v3172 = vshrl.u32 %v3171, 7
    %v3173 = vsub.s32 %v2874, %v3172
    %v3174 = vrot.slane %v2584, %v3173
    %v3175 = vlaneseq
    %v3176 = vshrl.u32 %v3175, 7
    %v3177 = vsub.s32 %v2874, %v3176
    %v3178 = vrot.slane %v2587, %v3177
    %v3179 = vlaneseq
    %v3180 = vshrl.u32 %v3179, 7
    %v3181 = vsub.s32 %v2874, %v3180
    %v3182 = vrot.slane %v2590, %v3181
    %v3183 = vlaneseq
    %v3184 = vshrl.u32 %v3183, 7
    %v3185 = vsub.s32 %v2874, %v3184
    %v3186 = vrot.slane %v2593, %v3185
    %v3187 = vlaneseq
    %v3188 = vshrl.u32 %v3187, 7
    %v3189 = vsub.s32 %v2874, %v3188
    %v3190 = vrot.slane %v2596, %v3189
    %v3191 = vlaneseq
    %v3192 = vshrl.u32 %v3191, 7
    %v3193 = vsub.s32 %v2874, %v3192
    %v3194 = vrot.slane %v2599, %v3193
    %v3195 = vlaneseq
    %v3196 = vshrl.u32 %v3195, 7
    %v3197 = vsub.s32 %v2874, %v3196
    %v3198 = vrot.slane %v2602, %v3197
    %v3199 = vlaneseq
    %v3200 = vshrl.u32 %v3199, 7
    %v3201 = vsub.s32 %v2874, %v3200
    %v3202 = vrot.slane %v2605, %v3201
    %v3203 = vlaneseq
    %v3204 = vshrl.u32 %v3203, 7
    %v3205 = vsub.s32 %v2874, %v3204
    %v3206 = vrot.slane %v2608, %v3205
    %v3207 = vlaneseq
    %v3208 = vshrl.u32 %v3207, 7
    %v3209 = vsub.s32 %v2874, %v3208
    %v3210 = vrot.slane %v2611, %v3209
    %v3211 = vlaneseq
    %v3212 = vshrl.u32 %v3211, 7
    %v3213 = vsub.s32 %v2874, %v3212
    %v3214 = vrot.slane %v2614, %v3213
    %v3215 = vlaneseq
    %v3216 = vshrl.u32 %v3215, 7
    %v3217 = vsub.s32 %v2874, %v3216
    %v3218 = vrot.slane %v2617, %v3217
    %v3219 = vlaneseq
    %v3220 = vshrl.u32 %v3219, 7
    %v3221 = vsub.s32 %v2874, %v3220
    %v3222 = vrot.slane %v2620, %v3221
    %v3223 = vlaneseq
    %v3224 = vshrl.u32 %v3223, 7
    %v3225 = vsub.s32 %v2874, %v3224
    %v3226 = vrot.slane %v2623, %v3225
    %v3227 = vlaneseq
    %v3228 = vshrl.u32 %v3227, 7
    %v3229 = vsub.s32 %v2874, %v3228
    %v3230 = vrot.slane %v2626, %v3229
    %v3231 = vlaneseq
    %v3232 = vshrl.u32 %v3231, 7
    %v3233 = vsub.s32 %v2874, %v3232
    %v3234 = vrot.slane %v2629, %v3233
    %v3235 = vlaneseq
    %v3236 = vshrl.u32 %v3235, 7
    %v3237 = vsub.s32 %v2874, %v3236
    %v3238 = vrot.slane %v2632, %v3237
    %v3239 = vlaneseq
    %v3240 = vshrl.u32 %v3239, 7
    %v3241 = vsub.s32 %v2874, %v3240
    %v3242 = vrot.slane %v2635, %v3241
    %v3243 = vlaneseq
    %v3244 = vshrl.u32 %v3243, 7
    %v3245 = vsub.s32 %v2874, %v3244
    %v3246 = vrot.slane %v2638, %v3245
    %v3247 = vlaneseq
    %v3248 = vshrl.u32 %v3247, 7
    %v3249 = vsub.s32 %v2874, %v3248
    %v3250 = vrot.slane %v2641, %v3249
    %v3251 = vlaneseq
    %v3252 = vshrl.u32 %v3251, 7
    %v3253 = vsub.s32 %v2874, %v3252
    %v3254 = vrot.slane %v2644, %v3253
    %v3255 = vlaneseq
    %v3256 = vshrl.u32 %v3255, 7
    %v3257 = vsub.s32 %v2874, %v3256
    %v3258 = vrot.slane %v2647, %v3257
    %v3259 = vlaneseq
    %v3260 = vshrl.u32 %v3259, 7
    %v3261 = vsub.s32 %v2874, %v3260
    %v3262 = vrot.slane %v2650, %v3261
    %v3263 = vlaneseq
    %v3264 = vshrl.u32 %v3263, 7
    %v3265 = vsub.s32 %v2874, %v3264
    %v3266 = vrot.slane %v2653, %v3265
    %v3267 = vlaneseq
    %v3268 = vshrl.u32 %v3267, 7
    %v3269 = vsub.s32 %v2874, %v3268
    %v3270 = vrot.slane %v2656, %v3269
    %v3271 = vlaneseq
    %v3272 = vshrl.u32 %v3271, 7
    %v3273 = vsub.s32 %v2874, %v3272
    %v3274 = vrot.slane %v2659, %v3273
    %v3275 = vlaneseq
    %v3276 = vshrl.u32 %v3275, 7
    %v3277 = vsub.s32 %v2874, %v3276
    %v3278 = vrot.slane %v2662, %v3277
    %v3279 = vlaneseq
    %v3280 = vshrl.u32 %v3279, 7
    %v3281 = vsub.s32 %v2874, %v3280
    %v3282 = vrot.slane %v2665, %v3281
    %v3283 = vlaneseq
    %v3284 = vshrl.u32 %v3283, 7
    %v3285 = vsub.s32 %v2874, %v3284
    %v3286 = vrot.slane %v2668, %v3285
    %v3287 = vlaneseq
    %v3288 = vshrl.u32 %v3287, 7
    %v3289 = vsub.s32 %v2874, %v3288
    %v3290 = vrot.slane %v2671, %v3289
    %v3291 = vlaneseq
    %v3292 = vshrl.u32 %v3291, 7
    %v3293 = vsub.s32 %v2874, %v3292
    %v3294 = vrot.slane %v2674, %v3293
    %v3295 = vlaneseq
    %v3296 = vshrl.u32 %v3295, 7
    %v3297 = vsub.s32 %v2874, %v3296
    %v3298 = vrot.slane %v2677, %v3297
    %v3299 = vlaneseq
    %v3300 = vshrl.u32 %v3299, 7
    %v3301 = vsub.s32 %v2874, %v3300
    %v3302 = vrot.slane %v2680, %v3301
    %v3303 = vlaneseq
    %v3304 = vshrl.u32 %v3303, 7
    %v3305 = vsub.s32 %v2874, %v3304
    %v3306 = vrot.slane %v2683, %v3305
    %v3307 = vlaneseq
    %v3308 = vshrl.u32 %v3307, 7
    %v3309 = vsub.s32 %v2874, %v3308
    %v3310 = vrot.slane %v2686, %v3309
    %v3311 = vlaneseq
    %v3312 = vshrl.u32 %v3311, 7
    %v3313 = vsub.s32 %v2874, %v3312
    %v3314 = vrot.slane %v2689, %v3313
    %v3315 = vlaneseq
    %v3316 = vshrl.u32 %v3315, 7
    %v3317 = vsub.s32 %v2874, %v3316
    %v3318 = vrot.slane %v2692, %v3317
    %v3319 = vlaneseq
    %v3320 = vshrl.u32 %v3319, 7
    %v3321 = vsub.s32 %v2874, %v3320
    %v3322 = vrot.slane %v2695, %v3321
    %v3323 = vlaneseq
    %v3324 = vshrl.u32 %v3323, 7
    %v3325 = vsub.s32 %v2874, %v3324
    %v3326 = vrot.slane %v2698, %v3325
    %v3327 = vlaneseq
    %v3328 = vshrl.u32 %v3327, 7
    %v3329 = vsub.s32 %v2874, %v3328
    %v3330 = vrot.slane %v2701, %v3329
    %v3331 = vlaneseq
    %v3332 = vshrl.u32 %v3331, 7
    %v3333 = vsub.s32 %v2874, %v3332
    %v3334 = vrot.slane %v2704, %v3333
    %v3335 = vlaneseq
    %v3336 = vshrl.u32 %v3335, 7
    %v3337 = vsub.s32 %v2874, %v3336
    %v3338 = vrot.slane %v2707, %v3337
    %v3339 = vlaneseq
    %v3340 = vshrl.u32 %v3339, 7
    %v3341 = vsub.s32 %v2874, %v3340
    %v3342 = vrot.slane %v2710, %v3341
    %v3343 = vlaneseq
    %v3344 = vshrl.u32 %v3343, 7
    %v3345 = vsub.s32 %v2874, %v3344
    %v3346 = vrot.slane %v2713, %v3345
    %v3347 = vlaneseq
    %v3348 = vshrl.u32 %v3347, 7
    %v3349 = vsub.s32 %v2874, %v3348
    %v3350 = vrot.slane %v2716, %v3349
    %v3351 = vlaneseq
    %v3352 = vshrl.u32 %v3351, 7
    %v3353 = vsub.s32 %v2874, %v3352
    %v3354 = vrot.slane %v2719, %v3353
    %v3355 = vlaneseq
    %v3356 = vshrl.u32 %v3355, 7
    %v3357 = vsub.s32 %v2874, %v3356
    %v3358 = vrot.slane %v2722, %v3357
    %v3359 = vlaneseq
    %v3360 = vshrl.u32 %v3359, 7
    %v3361 = vsub.s32 %v2874, %v3360
    %v3362 = vrot.slane %v2725, %v3361
    %v3363 = vlaneseq
    %v3364 = vshrl.u32 %v3363, 7
    %v3365 = vsub.s32 %v2874, %v3364
    %v3366 = vrot.slane %v2728, %v3365
    %v3367 = vlaneseq
    %v3368 = vshrl.u32 %v3367, 7
    %v3369 = vsub.s32 %v2874, %v3368
    %v3370 = vrot.slane %v2731, %v3369
    %v3371 = vlaneseq
    %v3372 = vshrl.u32 %v3371, 7
    %v3373 = vsub.s32 %v2874, %v3372
    %v3374 = vrot.slane %v2734, %v3373
    %v3375 = vlaneseq
    %v3376 = vshrl.u32 %v3375, 7
    %v3377 = vsub.s32 %v2874, %v3376
    %v3378 = vrot.slane %v2737, %v3377
    %v3379 = vlaneseq
    %v3380 = vshrl.u32 %v3379, 7
    %v3381 = vsub.s32 %v2874, %v3380
    %v3382 = vrot.slane %v2740, %v3381
    %v3383 = vlaneseq
    %v3384 = vshrl.u32 %v3383, 7
    %v3385 = vsub.s32 %v2874, %v3384
    %v3386 = vrot.slane %v2743, %v3385
    %vm3387 = vcmask 1041409
    %v3388 = vsel %vm3387, %v2882, %v2878
    %vm3389 = vcmask 1042434
    %v3390 = vsel %vm3389, %v2886, %v3388
    %vm3391 = vcmask 1043459
    %v3392 = vsel %vm3391, %v2890, %v3390
    %vm3393 = vcmask 1044484
    %v3394 = vsel %vm3393, %v2894, %v3392
    %vm3395 = vcmask 1045509
    %v3396 = vsel %vm3395, %v2898, %v3394
    %vm3397 = vcmask 1046534
    %v3398 = vsel %vm3397, %v2902, %v3396
    %vm3399 = vcmask 1047559
    %v3400 = vsel %vm3399, %v2906, %v3398
    %v3401 = vsel %vm3387, %v2914, %v2910
    %v3402 = vsel %vm3389, %v2918, %v3401
    %v3403 = vsel %vm3391, %v2922, %v3402
    %v3404 = vsel %vm3393, %v2926, %v3403
    %v3405 = vsel %vm3395, %v2930, %v3404
    %v3406 = vsel %vm3397, %v2934, %v3405
    %v3407 = vsel %vm3399, %v2938, %v3406
    %v3408 = vsel %vm3387, %v2946, %v2942
    %v3409 = vsel %vm3389, %v2950, %v3408
    %v3410 = vsel %vm3391, %v2954, %v3409
    %v3411 = vsel %vm3393, %v2958, %v3410
    %v3412 = vsel %vm3395, %v2962, %v3411
    %v3413 = vsel %vm3397, %v2966, %v3412
    %v3414 = vsel %vm3399, %v2970, %v3413
    %v3415 = vsel %vm3387, %v2978, %v2974
    %v3416 = vsel %vm3389, %v2982, %v3415
    %v3417 = vsel %vm3391, %v2986, %v3416
    %v3418 = vsel %vm3393, %v2990, %v3417
    %v3419 = vsel %vm3395, %v2994, %v3418
    %v3420 = vsel %vm3397, %v2998, %v3419
    %v3421 = vsel %vm3399, %v3002, %v3420
    %v3422 = vsel %vm3387, %v3010, %v3006
    %v3423 = vsel %vm3389, %v3014, %v3422
    %v3424 = vsel %vm3391, %v3018, %v3423
    %v3425 = vsel %vm3393, %v3022, %v3424
    %v3426 = vsel %vm3395, %v3026, %v3425
    %v3427 = vsel %vm3397, %v3030, %v3426
    %v3428 = vsel %vm3399, %v3034, %v3427
    %v3429 = vsel %vm3387, %v3042, %v3038
    %v3430 = vsel %vm3389, %v3046, %v3429
    %v3431 = vsel %vm3391, %v3050, %v3430
    %v3432 = vsel %vm3393, %v3054, %v3431
    %v3433 = vsel %vm3395, %v3058, %v3432
    %v3434 = vsel %vm3397, %v3062, %v3433
    %v3435 = vsel %vm3399, %v3066, %v3434
    %v3436 = vsel %vm3387, %v3074, %v3070
    %v3437 = vsel %vm3389, %v3078, %v3436
    %v3438 = vsel %vm3391, %v3082, %v3437
    %v3439 = vsel %vm3393, %v3086, %v3438
    %v3440 = vsel %vm3395, %v3090, %v3439
    %v3441 = vsel %vm3397, %v3094, %v3440
    %v3442 = vsel %vm3399, %v3098, %v3441
    %v3443 = vsel %vm3387, %v3106, %v3102
    %v3444 = vsel %vm3389, %v3110, %v3443
    %v3445 = vsel %vm3391, %v3114, %v3444
    %v3446 = vsel %vm3393, %v3118, %v3445
    %v3447 = vsel %vm3395, %v3122, %v3446
    %v3448 = vsel %vm3397, %v3126, %v3447
    %v3449 = vsel %vm3399, %v3130, %v3448
    %v3450 = vsel %vm3387, %v3138, %v3134
    %v3451 = vsel %vm3389, %v3142, %v3450
    %v3452 = vsel %vm3391, %v3146, %v3451
    %v3453 = vsel %vm3393, %v3150, %v3452
    %v3454 = vsel %vm3395, %v3154, %v3453
    %v3455 = vsel %vm3397, %v3158, %v3454
    %v3456 = vsel %vm3399, %v3162, %v3455
    %v3457 = vsel %vm3387, %v3170, %v3166
    %v3458 = vsel %vm3389, %v3174, %v3457
    %v3459 = vsel %vm3391, %v3178, %v3458
    %v3460 = vsel %vm3393, %v3182, %v3459
    %v3461 = vsel %vm3395, %v3186, %v3460
    %v3462 = vsel %vm3397, %v3190, %v3461
    %v3463 = vsel %vm3399, %v3194, %v3462
    %v3464 = vsel %vm3387, %v3202, %v3198
    %v3465 = vsel %vm3389, %v3206, %v3464
    %v3466 = vsel %vm3391, %v3210, %v3465
    %v3467 = vsel %vm3393, %v3214, %v3466
    %v3468 = vsel %vm3395, %v3218, %v3467
    %v3469 = vsel %vm3397, %v3222, %v3468
    %v3470 = vsel %vm3399, %v3226, %v3469
    %v3471 = vsel %vm3387, %v3234, %v3230
    %v3472 = vsel %vm3389, %v3238, %v3471
    %v3473 = vsel %vm3391, %v3242, %v3472
    %v3474 = vsel %vm3393, %v3246, %v3473
    %v3475 = vsel %vm3395, %v3250, %v3474
    %v3476 = vsel %vm3397, %v3254, %v3475
    %v3477 = vsel %vm3399, %v3258, %v3476
    %v3478 = vsel %vm3387, %v3266, %v3262
    %v3479 = vsel %vm3389, %v3270, %v3478
    %v3480 = vsel %vm3391, %v3274, %v3479
    %v3481 = vsel %vm3393, %v3278, %v3480
    %v3482 = vsel %vm3395, %v3282, %v3481
    %v3483 = vsel %vm3397, %v3286, %v3482
    %v3484 = vsel %vm3399, %v3290, %v3483
    %v3485 = vsel %vm3387, %v3298, %v3294
    %v3486 = vsel %vm3389, %v3302, %v3485
    %v3487 = vsel %vm3391, %v3306, %v3486
    %v3488 = vsel %vm3393, %v3310, %v3487
    %v3489 = vsel %vm3395, %v3314, %v3488
    %v3490 = vsel %vm3397, %v3318, %v3489
    %v3491 = vsel %vm3399, %v3322, %v3490
    %v3492 = vsel %vm3387, %v3330, %v3326
    %v3493 = vsel %vm3389, %v3334, %v3492
    %v3494 = vsel %vm3391, %v3338, %v3493
    %v3495 = vsel %vm3393, %v3342, %v3494
    %v3496 = vsel %vm3395, %v3346, %v3495
    %v3497 = vsel %vm3397, %v3350, %v3496
    %v3498 = vsel %vm3399, %v3354, %v3497
    %v3499 = vsel %vm3387, %v3362, %v3358
    %v3500 = vsel %vm3389, %v3366, %v3499
    %v3501 = vsel %vm3391, %v3370, %v3500
    %v3502 = vsel %vm3393, %v3374, %v3501
    %v3503 = vsel %vm3395, %v3378, %v3502
    %v3504 = vsel %vm3397, %v3382, %v3503
    %v3505 = vsel %vm3399, %v3386, %v3504
    %s3522 = scalar_lea.vmem [#allocation3], %s2744
    %vm3523 = vcmask 15360
    %3524 = vst.msk [vmem:[%s3522] sm:$0xff] %vm3523, %v3400
    %3525 = vst.msk [vmem:[%s3522 + $0x8] sm:$0xff] %vm3523, %v3407
    %3526 = vst.msk [vmem:[%s3522 + $0x10] sm:$0xff] %vm3523, %v3414
    %3527 = vst.msk [vmem:[%s3522 + $0x18] sm:$0xff] %vm3523, %v3421
    %3528 = vst.msk [vmem:[%s3522 + $0x20] sm:$0xff] %vm3523, %v3428
    %3529 = vst.msk [vmem:[%s3522 + $0x28] sm:$0xff] %vm3523, %v3435
    %3530 = vst.msk [vmem:[%s3522 + $0x30] sm:$0xff] %vm3523, %v3442
    %3531 = vst.msk [vmem:[%s3522 + $0x38] sm:$0xff] %vm3523, %v3449
    %3532 = vst.msk [vmem:[%s3522 + $0x40] sm:$0xff] %vm3523, %v3456
    %3533 = vst.msk [vmem:[%s3522 + $0x48] sm:$0xff] %vm3523, %v3463
    %3534 = vst.msk [vmem:[%s3522 + $0x50] sm:$0xff] %vm3523, %v3470
    %3535 = vst.msk [vmem:[%s3522 + $0x58] sm:$0xff] %vm3523, %v3477
    %3536 = vst.msk [vmem:[%s3522 + $0x60] sm:$0xff] %vm3523, %v3484
    %3537 = vst.msk [vmem:[%s3522 + $0x68] sm:$0xff] %vm3523, %v3491
    %3538 = vst.msk [vmem:[%s3522 + $0x70] sm:$0xff] %vm3523, %v3498
    %3539 = vst.msk [vmem:[%s3522 + $0x78] sm:$0xff] %vm3523, %v3505
    // Predicated region
    $region46: #{tpu_custom_call.1} parent=1 // pred_check
      %p3540 = pneg %p77
    $region47: #{tpu_custom_call.1} parent=1 // pred_check_branch
      %3542 = sbr.rel (%p3540) target = $region49
    $region48: #{tpu_custom_call.1} parent=1 // pred_region
      %v3543 = vld [vmem:[#allocation3] sm:$0xff]
      %v3544 = vld [vmem:[#allocation3 + $0x8] sm:$0xff]
      %v3545 = vld [vmem:[#allocation3 + $0x10] sm:$0xff]
      %v3546 = vld [vmem:[#allocation3 + $0x18] sm:$0xff]
      %v3547 = vld [vmem:[#allocation3 + $0x20] sm:$0xff]
      %v3548 = vld [vmem:[#allocation3 + $0x28] sm:$0xff]
      %v3549 = vld [vmem:[#allocation3 + $0x30] sm:$0xff]
      %v3550 = vld [vmem:[#allocation3 + $0x38] sm:$0xff]
      %v3551 = vld [vmem:[#allocation3 + $0x40] sm:$0xff]
      %v3552 = vld [vmem:[#allocation3 + $0x48] sm:$0xff]
      %v3553 = vld [vmem:[#allocation3 + $0x50] sm:$0xff]
      %v3554 = vld [vmem:[#allocation3 + $0x58] sm:$0xff]
      %v3555 = vld [vmem:[#allocation3 + $0x60] sm:$0xff]
      %v3556 = vld [vmem:[#allocation3 + $0x68] sm:$0xff]
      %v3557 = vld [vmem:[#allocation3 + $0x70] sm:$0xff]
      %v3558 = vld [vmem:[#allocation3 + $0x78] sm:$0xff]
      %3559 = vxpose.xlu0.b32.start [1/16] %v3543, 128
      %3560 = vxpose.xlu0.b32.cont [2/16] %v3544, 128
      %3561 = vxpose.xlu0.b32.cont [3/16] %v3545, 128
      %3562 = vxpose.xlu0.b32.cont [4/16] %v3546, 128
      %3563 = vxpose.xlu0.b32.cont [5/16] %v3547, 128
      %3564 = vxpose.xlu0.b32.cont [6/16] %v3548, 128
      %3565 = vxpose.xlu0.b32.cont [7/16] %v3549, 128
      %3566 = vxpose.xlu0.b32.cont [8/16] %v3550, 128
      %3567 = vxpose.xlu0.b32.cont [9/16] %v3551, 128
      %3568 = vxpose.xlu0.b32.cont [10/16] %v3552, 128
      %3569 = vxpose.xlu0.b32.cont [11/16] %v3553, 128
      %3570 = vxpose.xlu0.b32.cont [12/16] %v3554, 128
      %3571 = vxpose.xlu0.b32.cont [13/16] %v3555, 128
      %3572 = vxpose.xlu0.b32.cont [14/16] %v3556, 128
      %3573 = vxpose.xlu0.b32.cont [15/16] %v3557, 128
      %3574 = vxpose.xlu0.b32.end [16/16] %v3558, 128
      %v3575 = vpop.trf.xlu0
      %v3576 = vpop.trf.xlu0
      %v3577 = vpop.trf.xlu0
      %v3578 = vpop.trf.xlu0
      %v3579 = vpop.trf.xlu0
      %v3580 = vpop.trf.xlu0
      %v3581 = vpop.trf.xlu0
      %v3582 = vpop.trf.xlu0
      %v3583 = vpop.trf.xlu0
      %v3584 = vpop.trf.xlu0
      %v3585 = vpop.trf.xlu0
      %v3586 = vpop.trf.xlu0
      %v3587 = vpop.trf.xlu0
      %v3588 = vpop.trf.xlu0
      %v3589 = vpop.trf.xlu0
      %v3590 = vpop.trf.xlu0
      %vm3591 = vcmp.lt.s32.totalorder %v2874, 8
      %v3592 = vsel %vm3591, %v3575, -inf
      %vm3593 = vcmask 1041408
      %v3594 = vsel %vm3593, %v3592, -inf
      %3595 = vmax.xlane.f32.xlu0 %v3594
      %v3596 = vpop.xlane.xlu0 %3595
      %v3597 = vsub.f32 %v3592, %v3596
      %v3598 = vmul.f32 %v3597, 1.442695
      %v3599 = vpow.pop %v3598
      %v3600 = vsel %vm3593, %v3599, 0.0
      %3601 = vadd.xlane.f32.xlu0 %v3600
      %v3602 = vpop.xlane.xlu0 %3601
      %v3603 = vrcp.pop %v3602
      %v3604 = vmul.f32 %v3599, %v3603
      %3605 = vst [vmem:[#allocation12] sm:$0x3] %v3604
    $region49: #{tpu_custom_call.1} parent=1 // pred_fallthru
      _
    // Predicated region
    $region50: #{tpu_custom_call.1} parent=1 // pred_check
      _
    $region51: #{tpu_custom_call.1} parent=1 // pred_check_branch
      %3607 = sbr.rel (0) target = $region53
    $region52: #{tpu_custom_call.1} parent=1 // pred_region
      %s3609 = ssub.s32 32, 32
      %3610 = vsyncadd [#allocation6], %s3609
      %s3612 = sshll.u32 [#allocation12], 4
      %s3613 = int_to_ptr.vmem [resolvable:$true] %s3612
      %3615 = dma.vmem_to_hbm [thread:$0]  %s3613, 32, %s6, [#allocation6]
    $region53: #{tpu_custom_call.1} parent=1 // pred_fallthru
      _
    // Predicated region
    $region54: #{tpu_custom_call.1} parent=1 // pred_check
      _
    $region55: #{tpu_custom_call.1} parent=1 // pred_check_branch
      %3617 = sbr.rel (0) target = $region57
    $region56: #{tpu_custom_call.1} parent=1 // pred_region
      %3618 = dma.done [#allocation6], 32
    $region57: #{tpu_custom_call.1} parent=1 // pred_fallthru
      _
    %3619 = vsyncpa [#allocation5], 1
    %3620 = vsyncpa [#allocation8], 1
    %3621 = vsyncpa [#allocation11], 1
    %3622 = vsyncpa [#allocation6], 1

</llo_original>
